<compile_context>
chip_gen: v5e
topology: v5e:2x2
jax: 0.10.0
libtpu: 0.0.40
codegen_flags: <defaults>
</compile_context>

<pallas_src>
import functools
import math

import jax
import jax.numpy as jnp
import numpy as np
from jax.experimental import pallas as pl
from jax.experimental.pallas import tpu as pltpu

HEADS = 4
D_MODEL = 32
D_K = D_MODEL // HEADS


def mha_kernel(q_ref, k_ref, v_ref, wqkv_ref, bqkv_ref, wo_ref, bo_ref,
               out_ref, *, approx_recip):
    BB, S, D = q_ref.shape          # one block of BB batch elements
    H, DK = HEADS, D_K
    G = H * BB                      # merged (head, batch) batch axis

    # --- Activations, replicated across heads along the leading (major) axis ---
    # (keep input dtype; MXU accumulates in f32 via preferred_element_type)
    def rep_heads(a):               # (BB,S,D) -> (H*BB, S, D), leading dims only
        return jnp.broadcast_to(a[None], (H, BB, S, D)).reshape(G, S, D)

    xg = jnp.concatenate([rep_heads(q_ref[...]),
                          rep_heads(k_ref[...]),
                          rep_heads(v_ref[...])], axis=0)          # (3G, S, D)

    # --- Fused, head-major Q/K/V projection -------------------------------------
    # Weights are pre-transposed (in, out) and head-split at trace time; the
    # 1/sqrt(d_k) scale is already folded into the Q slice.  Replication over BB
    # only touches leading dims.
    w_big = jnp.broadcast_to(wqkv_ref[...][:, None],
                             (3 * H, BB, D, DK)).reshape(3 * G, D, DK)
    b_big = jnp.broadcast_to(bqkv_ref[...][:, None],
                             (3 * H, BB, 1, DK)).reshape(3 * G, 1, DK)
    proj = jnp.einsum("gsd,gdf->gsf", xg, w_big,
                      preferred_element_type=jnp.float32) + b_big   # (3G, S, dk)

    qh = proj[0 * G:1 * G]          # (G, S, dk)  -- already scaled by 1/sqrt(d_k)
    kh = proj[1 * G:2 * G]
    vh = proj[2 * G:3 * G]

    # --- Attention: batched over the merged (head, batch) axis ------------------
    s = jnp.einsum("gqd,gkd->gqk", qh, kh,
                   preferred_element_type=jnp.float32)              # (G, S, S)
    s = s - jnp.max(s, axis=-1, keepdims=True)
    e = jnp.exp(s)
    denom = jnp.sum(e, axis=-1, keepdims=True)
    # approx=True uses the EUP reciprocal estimate (review suggestion); kept
    # switchable so the strict 1e-4 validation below stays exact by default —
    # the denominator is only H*B*S elements, so the exact path costs ~nothing.
    p = e * pl.reciprocal(denom, approx=approx_recip)
    ctx = jnp.einsum("gqk,gkd->gqd", p, vh,
                     preferred_element_type=jnp.float32)            # (G, S, dk)

    # --- Output projection: contract heads & d_k without a lane-axis concat -----
    wo_big = jnp.broadcast_to(wo_ref[...][:, None],
                              (H, BB, DK, D)).reshape(G, DK, D)
    tmp = jnp.einsum("gsd,gdf->gsf", ctx, wo_big,
                     preferred_element_type=jnp.float32)            # (G, S, D)
    out = jnp.sum(tmp.reshape(H, BB, S, D), axis=0) + bo_ref[...]   # (BB, S, D)
    out_ref[...] = out.astype(out_ref.dtype)


def _pack_params(params):
    """Trace-time repack of PyTorch-layout Linear params into kernel layout."""
    scale = 1.0 / math.sqrt(D_K)

    def head_major(w):              # W:(out=D, in=D) -> W^T head-split: (H, D, d_k)
        return jnp.transpose(w.T.reshape(D_MODEL, HEADS, D_K), (1, 0, 2))

    def head_bias(b):               # (1, D) -> (H, 1, d_k)
        return b.reshape(HEADS, 1, D_K)

    wqkv = jnp.concatenate([head_major(params["wq"]) * scale,   # scale folded in
                            head_major(params["wk"]),
                            head_major(params["wv"])], axis=0)  # (3H, D, d_k)
    bqkv = jnp.concatenate([head_bias(params["bq"]) * scale,
                            head_bias(params["bk"]),
                            head_bias(params["bv"])], axis=0)   # (3H, 1, d_k)
    wo = params["wo"].T.reshape(HEADS, D_K, D_MODEL)            # (H, d_k, D)
    bo = params["bo"]                                           # (1, D)
    return wqkv, bqkv, wo, bo


def multi_head_attention(q, k, v, params, *, batch_block=None, approx_recip=False):
    B, S, D = q.shape
    assert D == D_MODEL
    BB = B if batch_block is None else batch_block   # batch_block=B//2 shards 2 TCs on v7x
    assert B % BB == 0

    wqkv, bqkv, wo, bo = _pack_params(params)

    act_spec = pl.BlockSpec((BB, S, D), lambda i: (i, 0, 0))
    const3 = lambda i: (0, 0, 0)
    const2 = lambda i: (0, 0)

    return pl.pallas_call(
        functools.partial(mha_kernel, approx_recip=approx_recip),
        out_shape=jax.ShapeDtypeStruct((B, S, D), q.dtype),
        grid_spec=pltpu.PrefetchScalarGridSpec(
            num_scalar_prefetch=0,
            grid=(B // BB,),
            in_specs=[act_spec, act_spec, act_spec,
                      pl.BlockSpec((3 * HEADS, D_MODEL, D_K), const3),
                      pl.BlockSpec((3 * HEADS, 1, D_K), const3),
                      pl.BlockSpec((HEADS, D_K, D_MODEL), const3),
                      pl.BlockSpec((1, D_MODEL), const2)],
            out_specs=act_spec,
        ),
        compiler_params=pltpu.CompilerParams(
            dimension_semantics=("parallel",)),
    )(q, k, v, wqkv, bqkv, wo, bo)


def _init_linear(key, fan_in, fan_out):
    # Deterministic PyTorch-style init: U(-1/sqrt(fan_in), 1/sqrt(fan_in)).
    kw, kb = jax.random.split(key)
    bound = 1.0 / math.sqrt(fan_in)
    w = jax.random.uniform(kw, (fan_out, fan_in), jnp.float32, -bound, bound)
    b = jax.random.uniform(kb, (1, fan_out), jnp.float32, -bound, bound)
    return w, b


def _reference(q, k, v, params):
    # Pure-JAX reference of the PyTorch forward (eval mode, mask=None).
    B, S, D = q.shape

    def lin(x, w, b):
        return x @ w.T + b

    qp = lin(q, params["wq"], params["bq"]).reshape(B, S, HEADS, D_K).transpose(0, 2, 1, 3)
    kp = lin(k, params["wk"], params["bk"]).reshape(B, S, HEADS, D_K).transpose(0, 2, 1, 3)
    vp = lin(v, params["wv"], params["bv"]).reshape(B, S, HEADS, D_K).transpose(0, 2, 1, 3)
    s = jnp.einsum("bhqd,bhkd->bhqk", qp, kp) / math.sqrt(D_K)
    p = jax.nn.softmax(s, axis=-1)
    o = jnp.einsum("bhqk,bhkd->bhqd", p, vp)
    concat = o.transpose(0, 2, 1, 3).reshape(B, S, D)
    return lin(concat, params["wo"], params["bo"])


if __name__ == "__main__":
    key = jax.random.PRNGKey(0)
    k_q, k_k, k_v, k_wq, k_wk, k_wv, k_wo = jax.random.split(key, 7)

    B, S = 2, 8
    q = jax.random.normal(k_q, (B, S, D_MODEL), jnp.float32)
    k = jax.random.normal(k_k, (B, S, D_MODEL), jnp.float32)
    v = jax.random.normal(k_v, (B, S, D_MODEL), jnp.float32)

    wq, bq = _init_linear(k_wq, D_MODEL, D_MODEL)
    wk, bk = _init_linear(k_wk, D_MODEL, D_MODEL)
    wv, bv = _init_linear(k_wv, D_MODEL, D_MODEL)
    wo, bo = _init_linear(k_wo, D_MODEL, D_MODEL)
    params = dict(wq=wq, bq=bq, wk=wk, bk=bk, wv=wv, bv=bv, wo=wo, bo=bo)

    out = multi_head_attention(q, k, v, params)
    out = jax.block_until_ready(out)

    ref = _reference(q, k, v, params)
    np.testing.assert_allclose(np.asarray(out), np.asarray(ref), rtol=1e-4, atol=1e-4)

    print("KERNEL_OK")
</pallas_src>

<mosaic_0001>
module attributes {stable_mosaic.version = 11 : i64} {
  func.func @mha_kernel(%arg0: i32, %arg1: memref<2x8x32xf32, #tpu.memory_space<vmem>>, %arg2: memref<2x8x32xf32, #tpu.memory_space<vmem>>, %arg3: memref<2x8x32xf32, #tpu.memory_space<vmem>>, %arg4: memref<12x32x8xf32, #tpu.memory_space<vmem>>, %arg5: memref<12x1x8xf32, #tpu.memory_space<vmem>>, %arg6: memref<4x8x32xf32, #tpu.memory_space<vmem>>, %arg7: memref<1x32xf32, #tpu.memory_space<vmem>>, %arg8: memref<2x8x32xf32, #tpu.memory_space<vmem>>) attributes {dimension_semantics = [#tpu.dimension_semantics<parallel>], iteration_bounds = array<i64: 1>, scalar_prefetch = 0 : i64, scratch_operands = 0 : i64, tpu.core_type = #tpu.core_type<tc>, window_params = [{transform_indices = @transform_0, window_bounds = array<i64: 2, 8, 32>}, {transform_indices = @transform_1, window_bounds = array<i64: 2, 8, 32>}, {transform_indices = @transform_2, window_bounds = array<i64: 2, 8, 32>}, {pipeline_mode = #tpu.pipeline_mode<synchronous>, transform_indices = @transform_3, window_bounds = array<i64: 12, 32, 8>}, {pipeline_mode = #tpu.pipeline_mode<synchronous>, transform_indices = @transform_4, window_bounds = array<i64: 12, 1, 8>}, {pipeline_mode = #tpu.pipeline_mode<synchronous>, transform_indices = @transform_5, window_bounds = array<i64: 4, 8, 32>}, {pipeline_mode = #tpu.pipeline_mode<synchronous>, transform_indices = @transform_6, window_bounds = array<i64: 1, 32>}, {transform_indices = @transform_7, window_bounds = array<i64: 2, 8, 32>}]} {
    %c0 = arith.constant 0 : index
    %c0_0 = arith.constant 0 : index
    %c0_1 = arith.constant 0 : index
    %0 = vector.load %arg1[%c0, %c0_0, %c0_1] : memref<2x8x32xf32, #tpu.memory_space<vmem>>, vector<2x8x32xf32>
    %1 = vector.shape_cast %0 : vector<2x8x32xf32> to vector<1x2x8x32xf32>
    %2 = vector.shape_cast %1 : vector<1x2x8x32xf32> to vector<1x2x8x32xf32>
    %3 = vector.broadcast %2 : vector<1x2x8x32xf32> to vector<4x2x8x32xf32>
    %4 = vector.shape_cast %3 : vector<4x2x8x32xf32> to vector<8x8x32xf32>
    %c0_2 = arith.constant 0 : index
    %c0_3 = arith.constant 0 : index
    %c0_4 = arith.constant 0 : index
    %5 = vector.load %arg2[%c0_2, %c0_3, %c0_4] : memref<2x8x32xf32, #tpu.memory_space<vmem>>, vector<2x8x32xf32>
    %6 = vector.shape_cast %5 : vector<2x8x32xf32> to vector<1x2x8x32xf32>
    %7 = vector.shape_cast %6 : vector<1x2x8x32xf32> to vector<1x2x8x32xf32>
    %8 = vector.broadcast %7 : vector<1x2x8x32xf32> to vector<4x2x8x32xf32>
    %9 = vector.shape_cast %8 : vector<4x2x8x32xf32> to vector<8x8x32xf32>
    %c0_5 = arith.constant 0 : index
    %c0_6 = arith.constant 0 : index
    %c0_7 = arith.constant 0 : index
    %10 = vector.load %arg3[%c0_5, %c0_6, %c0_7] : memref<2x8x32xf32, #tpu.memory_space<vmem>>, vector<2x8x32xf32>
    %11 = vector.shape_cast %10 : vector<2x8x32xf32> to vector<1x2x8x32xf32>
    %12 = vector.shape_cast %11 : vector<1x2x8x32xf32> to vector<1x2x8x32xf32>
    %13 = vector.broadcast %12 : vector<1x2x8x32xf32> to vector<4x2x8x32xf32>
    %14 = vector.shape_cast %13 : vector<4x2x8x32xf32> to vector<8x8x32xf32>
    %15 = tpu.concatenate %4, %9, %14 in 0 : vector<8x8x32xf32>, vector<8x8x32xf32>, vector<8x8x32xf32> -> vector<24x8x32xf32>
    %c0_8 = arith.constant 0 : index
    %c0_9 = arith.constant 0 : index
    %c0_10 = arith.constant 0 : index
    %16 = vector.load %arg4[%c0_8, %c0_9, %c0_10] : memref<12x32x8xf32, #tpu.memory_space<vmem>>, vector<12x32x8xf32>
    %17 = vector.shape_cast %16 : vector<12x32x8xf32> to vector<12x1x32x8xf32>
    %18 = vector.shape_cast %17 : vector<12x1x32x8xf32> to vector<12x1x32x8xf32>
    %19 = vector.broadcast %18 : vector<12x1x32x8xf32> to vector<12x2x32x8xf32>
    %20 = vector.shape_cast %19 : vector<12x2x32x8xf32> to vector<24x32x8xf32>
    %c0_11 = arith.constant 0 : index
    %c0_12 = arith.constant 0 : index
    %c0_13 = arith.constant 0 : index
    %21 = vector.load %arg5[%c0_11, %c0_12, %c0_13] : memref<12x1x8xf32, #tpu.memory_space<vmem>>, vector<12x1x8xf32>
    %22 = vector.shape_cast %21 : vector<12x1x8xf32> to vector<12x1x1x8xf32>
    %23 = vector.shape_cast %22 : vector<12x1x1x8xf32> to vector<12x1x1x8xf32>
    %24 = vector.broadcast %23 : vector<12x1x1x8xf32> to vector<12x2x1x8xf32>
    %25 = vector.shape_cast %24 : vector<12x2x1x8xf32> to vector<24x1x8xf32>
    "tpu.trace_start"() <{level = 10 : i32, message = "gsd,gdf->gsf"}> : () -> ()
    %cst = arith.constant dense<0.000000e+00> : vector<24x8x8xf32>
    %26 = tpu.matmul %15, %20, %cst {dimension_numbers = #tpu.dot_dimension_numbers<[2], [1], [1], [2], [0, 0, 0, 1, 1, 2], [0], [0]>} : vector<24x8x32xf32>, vector<24x32x8xf32>, vector<24x8x8xf32> -> vector<24x8x8xf32>
    "tpu.trace_stop"() : () -> ()
    %27 = vector.broadcast %25 : vector<24x1x8xf32> to vector<24x8x8xf32>
    %28 = arith.addf %26, %27 : vector<24x8x8xf32>
    %29 = vector.extract_strided_slice %28 {offsets = [0, 0, 0], sizes = [8, 8, 8], strides = [1, 1, 1]} : vector<24x8x8xf32> to vector<8x8x8xf32>
    %30 = vector.extract_strided_slice %28 {offsets = [8, 0, 0], sizes = [8, 8, 8], strides = [1, 1, 1]} : vector<24x8x8xf32> to vector<8x8x8xf32>
    %31 = vector.extract_strided_slice %28 {offsets = [16, 0, 0], sizes = [8, 8, 8], strides = [1, 1, 1]} : vector<24x8x8xf32> to vector<8x8x8xf32>
    "tpu.trace_start"() <{level = 10 : i32, message = "gqd,gkd->gqk"}> : () -> ()
    %cst_14 = arith.constant dense<0.000000e+00> : vector<8x8x8xf32>
    %32 = tpu.matmul %29, %30, %cst_14 {dimension_numbers = #tpu.dot_dimension_numbers<[2], [2], [1], [1], [0, 0, 0, 1, 1, 1], [0], [0]>} : vector<8x8x8xf32>, vector<8x8x8xf32>, vector<8x8x8xf32> -> vector<8x8x8xf32>
    "tpu.trace_stop"() : () -> ()
    %cst_15 = arith.constant dense<0xFF800000> : vector<8x8xf32>
    %33 = vector.multi_reduction <maximumf>, %32, %cst_15 [2] : vector<8x8x8xf32> to vector<8x8xf32>
    %34 = vector.shape_cast %33 : vector<8x8xf32> to vector<8x8x1xf32>
    %35 = vector.broadcast %34 : vector<8x8x1xf32> to vector<8x8x8xf32>
    %36 = arith.subf %32, %35 : vector<8x8x8xf32>
    %37 = math.exp %36 : vector<8x8x8xf32>
    %cst_16 = arith.constant dense<0.000000e+00> : vector<8x8xf32>
    %38 = vector.multi_reduction <add>, %37, %cst_16 [2] : vector<8x8x8xf32> to vector<8x8xf32>
    %39 = vector.shape_cast %38 : vector<8x8xf32> to vector<8x8x1xf32>
    %40 = tpu.reciprocal %39 : vector<8x8x1xf32> -> vector<8x8x1xf32>
    %41 = vector.broadcast %40 : vector<8x8x1xf32> to vector<8x8x8xf32>
    %42 = arith.mulf %37, %41 : vector<8x8x8xf32>
    "tpu.trace_start"() <{level = 10 : i32, message = "gqk,gkd->gqd"}> : () -> ()
    %cst_17 = arith.constant dense<0.000000e+00> : vector<8x8x8xf32>
    %43 = tpu.matmul %42, %31, %cst_17 {dimension_numbers = #tpu.dot_dimension_numbers<[2], [1], [1], [2], [0, 0, 0, 1, 1, 2], [0], [0]>} : vector<8x8x8xf32>, vector<8x8x8xf32>, vector<8x8x8xf32> -> vector<8x8x8xf32>
    "tpu.trace_stop"() : () -> ()
    %c0_18 = arith.constant 0 : index
    %c0_19 = arith.constant 0 : index
    %c0_20 = arith.constant 0 : index
    %44 = vector.load %arg6[%c0_18, %c0_19, %c0_20] : memref<4x8x32xf32, #tpu.memory_space<vmem>>, vector<4x8x32xf32>
    %45 = vector.shape_cast %44 : vector<4x8x32xf32> to vector<4x1x8x32xf32>
    %46 = vector.shape_cast %45 : vector<4x1x8x32xf32> to vector<4x1x8x32xf32>
    %47 = vector.broadcast %46 : vector<4x1x8x32xf32> to vector<4x2x8x32xf32>
    %48 = vector.shape_cast %47 : vector<4x2x8x32xf32> to vector<8x8x32xf32>
    "tpu.trace_start"() <{level = 10 : i32, message = "gsd,gdf->gsf"}> : () -> ()
    %cst_21 = arith.constant dense<0.000000e+00> : vector<8x8x32xf32>
    %49 = tpu.matmul %43, %48, %cst_21 {dimension_numbers = #tpu.dot_dimension_numbers<[2], [1], [1], [2], [0, 0, 0, 1, 1, 2], [0], [0]>} : vector<8x8x8xf32>, vector<8x8x32xf32>, vector<8x8x32xf32> -> vector<8x8x32xf32>
    "tpu.trace_stop"() : () -> ()
    %50 = vector.shape_cast %49 : vector<8x8x32xf32> to vector<4x2x8x32xf32>
    %cst_22 = arith.constant dense<0.000000e+00> : vector<2x8x32xf32>
    %51 = vector.multi_reduction <add>, %50, %cst_22 [0] : vector<4x2x8x32xf32> to vector<2x8x32xf32>
    %c0_23 = arith.constant 0 : index
    %c0_24 = arith.constant 0 : index
    %52 = vector.load %arg7[%c0_23, %c0_24] : memref<1x32xf32, #tpu.memory_space<vmem>>, vector<1x32xf32>
    %53 = vector.shape_cast %52 : vector<1x32xf32> to vector<1x1x32xf32>
    %54 = vector.broadcast %53 : vector<1x1x32xf32> to vector<2x8x32xf32>
    %55 = arith.addf %51, %54 : vector<2x8x32xf32>
    %c0_25 = arith.constant 0 : index
    %c0_26 = arith.constant 0 : index
    %c0_27 = arith.constant 0 : index
    %56 = vector.load %arg8[%c0_25, %c0_26, %c0_27] : memref<2x8x32xf32, #tpu.memory_space<vmem>>, vector<2x8x32xf32>
    tpu.vector_store %arg8[%c0_25, %c0_26, %c0_27], %55 {strides = array<i32>} : memref<2x8x32xf32, #tpu.memory_space<vmem>>, vector<2x8x32xf32>,
    return
  }
  func.func @transform_0(%arg0: i32) -> (i32, i32, i32) {
    %c0_i32 = arith.constant 0 : i32
    %c0_i32_0 = arith.constant 0 : i32
    %c0_i32_1 = arith.constant 0 : i32
    return %arg0, %c0_i32, %c0_i32_0 : i32, i32, i32
  }
  func.func @transform_1(%arg0: i32) -> (i32, i32, i32) {
    %c0_i32 = arith.constant 0 : i32
    %c0_i32_0 = arith.constant 0 : i32
    %c0_i32_1 = arith.constant 0 : i32
    return %arg0, %c0_i32, %c0_i32_0 : i32, i32, i32
  }
  func.func @transform_2(%arg0: i32) -> (i32, i32, i32) {
    %c0_i32 = arith.constant 0 : i32
    %c0_i32_0 = arith.constant 0 : i32
    %c0_i32_1 = arith.constant 0 : i32
    return %arg0, %c0_i32, %c0_i32_0 : i32, i32, i32
  }
  func.func @transform_3(%arg0: i32) -> (i32, i32, i32) {
    %c0_i32 = arith.constant 0 : i32
    %c0_i32_0 = arith.constant 0 : i32
    %c0_i32_1 = arith.constant 0 : i32
    %c0_i32_2 = arith.constant 0 : i32
    return %c0_i32, %c0_i32_0, %c0_i32_1 : i32, i32, i32
  }
  func.func @transform_4(%arg0: i32) -> (i32, i32, i32) {
    %c0_i32 = arith.constant 0 : i32
    %c0_i32_0 = arith.constant 0 : i32
    %c0_i32_1 = arith.constant 0 : i32
    %c0_i32_2 = arith.constant 0 : i32
    return %c0_i32, %c0_i32_0, %c0_i32_1 : i32, i32, i32
  }
  func.func @transform_5(%arg0: i32) -> (i32, i32, i32) {
    %c0_i32 = arith.constant 0 : i32
    %c0_i32_0 = arith.constant 0 : i32
    %c0_i32_1 = arith.constant 0 : i32
    %c0_i32_2 = arith.constant 0 : i32
    return %c0_i32, %c0_i32_0, %c0_i32_1 : i32, i32, i32
  }
  func.func @transform_6(%arg0: i32) -> (i32, i32) {
    %c0_i32 = arith.constant 0 : i32
    %c0_i32_0 = arith.constant 0 : i32
    %c0_i32_1 = arith.constant 0 : i32
    return %c0_i32, %c0_i32_0 : i32, i32
  }
  func.func @transform_7(%arg0: i32) -> (i32, i32, i32) {
    %c0_i32 = arith.constant 0 : i32
    %c0_i32_0 = arith.constant 0 : i32
    %c0_i32_1 = arith.constant 0 : i32
    return %arg0, %c0_i32, %c0_i32_0 : i32, i32, i32
  }
}

</mosaic_0001>

<llo_original>
// kernel: tpu_custom_call.1
$region0: #{tpu_custom_call.1}
  #allocation0 [shape = 'u32[]', space=smem, size = 0x4, offset = 0x4, fixed_abs, tag = 'smem constant byte address 0x4 - core index']
  #allocation1 [shape = 'u32[72,128]{1,0:T(1,128)}', space=vmem, size = 0x9000, scoped, tag = 'internal scratch']
  %s0 = inlined_call_operand.vmem [shape: f32[2,8,32], index: 0, kind: input, shape index: {}]
  %s1 = inlined_call_operand.vmem [shape: f32[2,8,32], index: 1, kind: input, shape index: {}]
  %s2 = inlined_call_operand.vmem [shape: f32[2,8,32], index: 2, kind: input, shape index: {}]
  %s3 = inlined_call_operand.vmem [shape: f32[12,32,8], index: 3, kind: input, shape index: {}]
  %s4 = inlined_call_operand.vmem [shape: f32[12,1,8], index: 4, kind: input, shape index: {}]
  %s5 = inlined_call_operand.vmem [shape: f32[4,8,32], index: 5, kind: input, shape index: {}]
  %s6 = inlined_call_operand.vmem [shape: f32[1,32], index: 6, kind: input, shape index: {}]
  %s7 = inlined_call_operand.hbm [shape: f32[2,8,32], index: 7, kind: output, shape index: {}]
  %s8 = sld [smem:[#allocation0]]
  $region38: #{tpu_custom_call.1} parent=0
    _
  %s10 = ssub.s32 1, %s8
  %s11 = scalar_select 0, %s10, %s8
  $region1: #{tpu_custom_call.1} parent=0
    #allocation2 [shape = 'u8[8192]{0}', space=vmem, size = 0x2000, scoped, tag = 'output window, operand 0, single buffered']
    #allocation3 [shape = 's32[1]{0}', space=sflag, size = 0x4, scoped, tag = 'scoped memory for tpu_custom_call.1']
    %12 = vsyncpa [#allocation3], 0
    // Predicated region
    $region2: #{tpu_custom_call.1} parent=1 // pred_check
      _
    $region3: #{tpu_custom_call.1} parent=1 // pred_check_branch
      %14 = sbr.rel (0) target = $region5
    $region4: #{tpu_custom_call.1} parent=1 // pred_region
      _
    $region5: #{tpu_custom_call.1} parent=1 // pred_fallthru
      _
    // Predicated region
    $region6: #{tpu_custom_call.1} parent=1 // pred_check
      _
    $region7: #{tpu_custom_call.1} parent=1 // pred_check_branch
      %16 = sbr.rel (0) target = $region9
    $region8: #{tpu_custom_call.1} parent=1 // pred_region
      _
    $region9: #{tpu_custom_call.1} parent=1 // pred_fallthru
      _
    // Predicated region
    $region10: #{tpu_custom_call.1} parent=1 // pred_check
      _
    $region11: #{tpu_custom_call.1} parent=1 // pred_check_branch
      %18 = sbr.rel (0) target = $region13
    $region12: #{tpu_custom_call.1} parent=1 // pred_region
      _
    $region13: #{tpu_custom_call.1} parent=1 // pred_fallthru
      _
    // Predicated region
    $region14: #{tpu_custom_call.1} parent=1 // pred_check
      _
    $region15: #{tpu_custom_call.1} parent=1 // pred_check_branch
      %20 = sbr.rel (0) target = $region17
    $region16: #{tpu_custom_call.1} parent=1 // pred_region
      _
    $region17: #{tpu_custom_call.1} parent=1 // pred_fallthru
      _
    // Predicated region
    $region18: #{tpu_custom_call.1} parent=1 // pred_check
      _
    $region19: #{tpu_custom_call.1} parent=1 // pred_check_branch
      %22 = sbr.rel (0) target = $region21
    $region20: #{tpu_custom_call.1} parent=1 // pred_region
      _
    $region21: #{tpu_custom_call.1} parent=1 // pred_fallthru
      _
    // Predicated region
    $region22: #{tpu_custom_call.1} parent=1 // pred_check
      _
    $region23: #{tpu_custom_call.1} parent=1 // pred_check_branch
      %24 = sbr.rel (0) target = $region25
    $region24: #{tpu_custom_call.1} parent=1 // pred_region
      _
    $region25: #{tpu_custom_call.1} parent=1 // pred_fallthru
      _
    // Predicated region
    $region26: #{tpu_custom_call.1} parent=1 // pred_check
      _
    $region27: #{tpu_custom_call.1} parent=1 // pred_check_branch
      %26 = sbr.rel (0) target = $region29
    $region28: #{tpu_custom_call.1} parent=1 // pred_region
      _
    $region29: #{tpu_custom_call.1} parent=1 // pred_fallthru
      _
    %v27 = vld [vmem:[%s0] sm:$0xff]
    %v28 = vld [vmem:[%s0 + $0x8] sm:$0xff]
    %v29 = vld [vmem:[%s1] sm:$0xff]
    %v30 = vld [vmem:[%s1 + $0x8] sm:$0xff]
    %v31 = vld [vmem:[%s2] sm:$0xff]
    %v32 = vld [vmem:[%s2 + $0x8] sm:$0xff]
    %v33 = vld [vmem:[%s3] sm:$0xff]
    %v34 = vld [vmem:[%s3 + $0x8] sm:$0xff]
    %v35 = vld [vmem:[%s3 + $0x10] sm:$0xff]
    %v36 = vld [vmem:[%s3 + $0x18] sm:$0xff]
    %v37 = vld [vmem:[%s3 + $0x20] sm:$0xff]
    %v38 = vld [vmem:[%s3 + $0x28] sm:$0xff]
    %v39 = vld [vmem:[%s3 + $0x30] sm:$0xff]
    %v40 = vld [vmem:[%s3 + $0x38] sm:$0xff]
    %v41 = vld [vmem:[%s3 + $0x40] sm:$0xff]
    %v42 = vld [vmem:[%s3 + $0x48] sm:$0xff]
    %v43 = vld [vmem:[%s3 + $0x50] sm:$0xff]
    %v44 = vld [vmem:[%s3 + $0x58] sm:$0xff]
    %v45 = vld [vmem:[%s3 + $0x60] sm:$0xff]
    %v46 = vld [vmem:[%s3 + $0x68] sm:$0xff]
    %v47 = vld [vmem:[%s3 + $0x70] sm:$0xff]
    %v48 = vld [vmem:[%s3 + $0x78] sm:$0xff]
    %v49 = vld [vmem:[%s3 + $0x80] sm:$0xff]
    %v50 = vld [vmem:[%s3 + $0x88] sm:$0xff]
    %v51 = vld [vmem:[%s3 + $0x90] sm:$0xff]
    %v52 = vld [vmem:[%s3 + $0x98] sm:$0xff]
    %v53 = vld [vmem:[%s3 + $0xa0] sm:$0xff]
    %v54 = vld [vmem:[%s3 + $0xa8] sm:$0xff]
    %v55 = vld [vmem:[%s3 + $0xb0] sm:$0xff]
    %v56 = vld [vmem:[%s3 + $0xb8] sm:$0xff]
    %v57 = vld [vmem:[%s3 + $0xc0] sm:$0xff]
    %v58 = vld [vmem:[%s3 + $0xc8] sm:$0xff]
    %v59 = vld [vmem:[%s3 + $0xd0] sm:$0xff]
    %v60 = vld [vmem:[%s3 + $0xd8] sm:$0xff]
    %v61 = vld [vmem:[%s3 + $0xe0] sm:$0xff]
    %v62 = vld [vmem:[%s3 + $0xe8] sm:$0xff]
    %v63 = vld [vmem:[%s3 + $0xf0] sm:$0xff]
    %v64 = vld [vmem:[%s3 + $0xf8] sm:$0xff]
    %v65 = vld [vmem:[%s3 + $0x100] sm:$0xff]
    %v66 = vld [vmem:[%s3 + $0x108] sm:$0xff]
    %v67 = vld [vmem:[%s3 + $0x110] sm:$0xff]
    %v68 = vld [vmem:[%s3 + $0x118] sm:$0xff]
    %v69 = vld [vmem:[%s3 + $0x120] sm:$0xff]
    %v70 = vld [vmem:[%s3 + $0x128] sm:$0xff]
    %v71 = vld [vmem:[%s3 + $0x130] sm:$0xff]
    %v72 = vld [vmem:[%s3 + $0x138] sm:$0xff]
    %v73 = vld [vmem:[%s3 + $0x140] sm:$0xff]
    %v74 = vld [vmem:[%s3 + $0x148] sm:$0xff]
    %v75 = vld [vmem:[%s3 + $0x150] sm:$0xff]
    %v76 = vld [vmem:[%s3 + $0x158] sm:$0xff]
    %v77 = vld [vmem:[%s3 + $0x160] sm:$0xff]
    %v78 = vld [vmem:[%s3 + $0x168] sm:$0xff]
    %v79 = vld [vmem:[%s3 + $0x170] sm:$0xff]
    %v80 = vld [vmem:[%s3 + $0x178] sm:$0xff]
    %v81 = vld [vmem:[%s4] sm:$0x1]
    %v82 = vld [vmem:[%s4 + $0x1] sm:$0x1]
    %v83 = vld [vmem:[%s4 + $0x2] sm:$0x1]
    %v84 = vld [vmem:[%s4 + $0x3] sm:$0x1]
    %v85 = vld [vmem:[%s4 + $0x4] sm:$0x1]
    %v86 = vld [vmem:[%s4 + $0x5] sm:$0x1]
    %v87 = vld [vmem:[%s4 + $0x6] sm:$0x1]
    %v88 = vld [vmem:[%s4 + $0x7] sm:$0x1]
    %v89 = vld [vmem:[%s4 + $0x8] sm:$0x1]
    %v90 = vld [vmem:[%s4 + $0x9] sm:$0x1]
    %v91 = vld [vmem:[%s4 + $0xa] sm:$0x1]
    %v92 = vld [vmem:[%s4 + $0xb] sm:$0x1]
    %v105 = vperm.slane %v81, 0
    %v106 = vperm.slane %v82, 0
    %v107 = vperm.slane %v83, 0
    %v108 = vperm.slane %v84, 0
    %v109 = vperm.slane %v85, 0
    %v110 = vperm.slane %v86, 0
    %v111 = vperm.slane %v87, 0
    %v112 = vperm.slane %v88, 0
    %v113 = vperm.slane %v89, 0
    %v114 = vperm.slane %v90, 0
    %v115 = vperm.slane %v91, 0
    %v116 = vperm.slane %v92, 0
    %vm129 = vcmask 261120
    %v131 = vsel %vm129, %v27, 0
    %133 = vmatpush.msra.mxu0 0.0
    %134 = vmatpush.msra.mxu0 0.0
    %135 = vmatpush.msra.mxu0 0.0
    %136 = vmatpush.msra.mxu0 0.0
    %137 = vmatpush.msra.mxu0 0.0
    %138 = vmatpush.msra.mxu0 0.0
    %139 = vmatpush.msra.mxu0 0.0
    %140 = vmatpush.msra.mxu0 0.0
    %141 = vmatpush.msra.mxu0 0.0
    %142 = vmatpush.msra.mxu0 0.0
    %143 = vmatpush.msra.mxu0 0.0
    %144 = vmatpush.msra.mxu0 0.0
    %145 = vmatpush.msra.mxu0 %v36
    %146 = vmatpush.msra.mxu0 %v35
    %147 = vmatpush.msra.mxu0 %v34
    %148 = vmatpush.msra.mxu0 %v33
    %149 = vmatmul.f32.gmra.mxu0 %v131
    %v150 = vpop.f32.mrf.mxu0
    %v151 = vadd.f32 %v105, %v150
    %152 = vdwg.mxu0
    %v154 = vsel %vm129, %v28, 0
    %156 = vmatpush.msra.mxu0 0.0
    %157 = vmatpush.msra.mxu0 0.0
    %158 = vmatpush.msra.mxu0 0.0
    %159 = vmatpush.msra.mxu0 0.0
    %160 = vmatpush.msra.mxu0 0.0
    %161 = vmatpush.msra.mxu0 0.0
    %162 = vmatpush.msra.mxu0 0.0
    %163 = vmatpush.msra.mxu0 0.0
    %164 = vmatpush.msra.mxu0 0.0
    %165 = vmatpush.msra.mxu0 0.0
    %166 = vmatpush.msra.mxu0 0.0
    %167 = vmatpush.msra.mxu0 0.0
    %168 = vmatpush.msra.mxu0 %v36
    %169 = vmatpush.msra.mxu0 %v35
    %170 = vmatpush.msra.mxu0 %v34
    %171 = vmatpush.msra.mxu0 %v33
    %172 = vmatmul.f32.gmra.mxu0 %v154
    %v173 = vpop.f32.mrf.mxu0
    %v174 = vadd.f32 %v105, %v173
    %175 = vdwg.mxu0
    %176 = vmatpush.msra.mxu0 0.0
    %177 = vmatpush.msra.mxu0 0.0
    %178 = vmatpush.msra.mxu0 0.0
    %179 = vmatpush.msra.mxu0 0.0
    %180 = vmatpush.msra.mxu0 0.0
    %181 = vmatpush.msra.mxu0 0.0
    %182 = vmatpush.msra.mxu0 0.0
    %183 = vmatpush.msra.mxu0 0.0
    %184 = vmatpush.msra.mxu0 0.0
    %185 = vmatpush.msra.mxu0 0.0
    %186 = vmatpush.msra.mxu0 0.0
    %187 = vmatpush.msra.mxu0 0.0
    %188 = vmatpush.msra.mxu0 %v40
    %189 = vmatpush.msra.mxu0 %v39
    %190 = vmatpush.msra.mxu0 %v38
    %191 = vmatpush.msra.mxu0 %v37
    %192 = vmatmul.f32.gmra.mxu0 %v131
    %v193 = vpop.f32.mrf.mxu0
    %v194 = vadd.f32 %v106, %v193
    %195 = vdwg.mxu0
    %196 = vmatpush.msra.mxu0 0.0
    %197 = vmatpush.msra.mxu0 0.0
    %198 = vmatpush.msra.mxu0 0.0
    %199 = vmatpush.msra.mxu0 0.0
    %200 = vmatpush.msra.mxu0 0.0
    %201 = vmatpush.msra.mxu0 0.0
    %202 = vmatpush.msra.mxu0 0.0
    %203 = vmatpush.msra.mxu0 0.0
    %204 = vmatpush.msra.mxu0 0.0
    %205 = vmatpush.msra.mxu0 0.0
    %206 = vmatpush.msra.mxu0 0.0
    %207 = vmatpush.msra.mxu0 0.0
    %208 = vmatpush.msra.mxu0 %v40
    %209 = vmatpush.msra.mxu0 %v39
    %210 = vmatpush.msra.mxu0 %v38
    %211 = vmatpush.msra.mxu0 %v37
    %212 = vmatmul.f32.gmra.mxu0 %v154
    %v213 = vpop.f32.mrf.mxu0
    %v214 = vadd.f32 %v106, %v213
    %215 = vdwg.mxu0
    %216 = vmatpush.msra.mxu0 0.0
    %217 = vmatpush.msra.mxu0 0.0
    %218 = vmatpush.msra.mxu0 0.0
    %219 = vmatpush.msra.mxu0 0.0
    %220 = vmatpush.msra.mxu0 0.0
    %221 = vmatpush.msra.mxu0 0.0
    %222 = vmatpush.msra.mxu0 0.0
    %223 = vmatpush.msra.mxu0 0.0
    %224 = vmatpush.msra.mxu0 0.0
    %225 = vmatpush.msra.mxu0 0.0
    %226 = vmatpush.msra.mxu0 0.0
    %227 = vmatpush.msra.mxu0 0.0
    %228 = vmatpush.msra.mxu0 %v44
    %229 = vmatpush.msra.mxu0 %v43
    %230 = vmatpush.msra.mxu0 %v42
    %231 = vmatpush.msra.mxu0 %v41
    %232 = vmatmul.f32.gmra.mxu0 %v131
    %v233 = vpop.f32.mrf.mxu0
    %v234 = vadd.f32 %v107, %v233
    %235 = vdwg.mxu0
    %236 = vmatpush.msra.mxu0 0.0
    %237 = vmatpush.msra.mxu0 0.0
    %238 = vmatpush.msra.mxu0 0.0
    %239 = vmatpush.msra.mxu0 0.0
    %240 = vmatpush.msra.mxu0 0.0
    %241 = vmatpush.msra.mxu0 0.0
    %242 = vmatpush.msra.mxu0 0.0
    %243 = vmatpush.msra.mxu0 0.0
    %244 = vmatpush.msra.mxu0 0.0
    %245 = vmatpush.msra.mxu0 0.0
    %246 = vmatpush.msra.mxu0 0.0
    %247 = vmatpush.msra.mxu0 0.0
    %248 = vmatpush.msra.mxu0 %v44
    %249 = vmatpush.msra.mxu0 %v43
    %250 = vmatpush.msra.mxu0 %v42
    %251 = vmatpush.msra.mxu0 %v41
    %252 = vmatmul.f32.gmra.mxu0 %v154
    %v253 = vpop.f32.mrf.mxu0
    %v254 = vadd.f32 %v107, %v253
    %255 = vdwg.mxu0
    %256 = vmatpush.msra.mxu0 0.0
    %257 = vmatpush.msra.mxu0 0.0
    %258 = vmatpush.msra.mxu0 0.0
    %259 = vmatpush.msra.mxu0 0.0
    %260 = vmatpush.msra.mxu0 0.0
    %261 = vmatpush.msra.mxu0 0.0
    %262 = vmatpush.msra.mxu0 0.0
    %263 = vmatpush.msra.mxu0 0.0
    %264 = vmatpush.msra.mxu0 0.0
    %265 = vmatpush.msra.mxu0 0.0
    %266 = vmatpush.msra.mxu0 0.0
    %267 = vmatpush.msra.mxu0 0.0
    %268 = vmatpush.msra.mxu0 %v48
    %269 = vmatpush.msra.mxu0 %v47
    %270 = vmatpush.msra.mxu0 %v46
    %271 = vmatpush.msra.mxu0 %v45
    %272 = vmatmul.f32.gmra.mxu0 %v131
    %v273 = vpop.f32.mrf.mxu0
    %v274 = vadd.f32 %v108, %v273
    %275 = vdwg.mxu0
    %276 = vmatpush.msra.mxu0 0.0
    %277 = vmatpush.msra.mxu0 0.0
    %278 = vmatpush.msra.mxu0 0.0
    %279 = vmatpush.msra.mxu0 0.0
    %280 = vmatpush.msra.mxu0 0.0
    %281 = vmatpush.msra.mxu0 0.0
    %282 = vmatpush.msra.mxu0 0.0
    %283 = vmatpush.msra.mxu0 0.0
    %284 = vmatpush.msra.mxu0 0.0
    %285 = vmatpush.msra.mxu0 0.0
    %286 = vmatpush.msra.mxu0 0.0
    %287 = vmatpush.msra.mxu0 0.0
    %288 = vmatpush.msra.mxu0 %v48
    %289 = vmatpush.msra.mxu0 %v47
    %290 = vmatpush.msra.mxu0 %v46
    %291 = vmatpush.msra.mxu0 %v45
    %292 = vmatmul.f32.gmra.mxu0 %v154
    %v293 = vpop.f32.mrf.mxu0
    %v294 = vadd.f32 %v108, %v293
    %295 = vdwg.mxu0
    %v297 = vsel %vm129, %v29, 0
    %299 = vmatpush.msra.mxu0 0.0
    %300 = vmatpush.msra.mxu0 0.0
    %301 = vmatpush.msra.mxu0 0.0
    %302 = vmatpush.msra.mxu0 0.0
    %303 = vmatpush.msra.mxu0 0.0
    %304 = vmatpush.msra.mxu0 0.0
    %305 = vmatpush.msra.mxu0 0.0
    %306 = vmatpush.msra.mxu0 0.0
    %307 = vmatpush.msra.mxu0 0.0
    %308 = vmatpush.msra.mxu0 0.0
    %309 = vmatpush.msra.mxu0 0.0
    %310 = vmatpush.msra.mxu0 0.0
    %311 = vmatpush.msra.mxu0 %v52
    %312 = vmatpush.msra.mxu0 %v51
    %313 = vmatpush.msra.mxu0 %v50
    %314 = vmatpush.msra.mxu0 %v49
    %315 = vmatmul.f32.gmra.mxu0 %v297
    %v316 = vpop.f32.mrf.mxu0
    %v317 = vadd.f32 %v109, %v316
    %318 = vdwg.mxu0
    %v320 = vsel %vm129, %v30, 0
    %322 = vmatpush.msra.mxu0 0.0
    %323 = vmatpush.msra.mxu0 0.0
    %324 = vmatpush.msra.mxu0 0.0
    %325 = vmatpush.msra.mxu0 0.0
    %326 = vmatpush.msra.mxu0 0.0
    %327 = vmatpush.msra.mxu0 0.0
    %328 = vmatpush.msra.mxu0 0.0
    %329 = vmatpush.msra.mxu0 0.0
    %330 = vmatpush.msra.mxu0 0.0
    %331 = vmatpush.msra.mxu0 0.0
    %332 = vmatpush.msra.mxu0 0.0
    %333 = vmatpush.msra.mxu0 0.0
    %334 = vmatpush.msra.mxu0 %v52
    %335 = vmatpush.msra.mxu0 %v51
    %336 = vmatpush.msra.mxu0 %v50
    %337 = vmatpush.msra.mxu0 %v49
    %338 = vmatmul.f32.gmra.mxu0 %v320
    %v339 = vpop.f32.mrf.mxu0
    %v340 = vadd.f32 %v109, %v339
    %341 = vdwg.mxu0
    %342 = vmatpush.msra.mxu0 0.0
    %343 = vmatpush.msra.mxu0 0.0
    %344 = vmatpush.msra.mxu0 0.0
    %345 = vmatpush.msra.mxu0 0.0
    %346 = vmatpush.msra.mxu0 0.0
    %347 = vmatpush.msra.mxu0 0.0
    %348 = vmatpush.msra.mxu0 0.0
    %349 = vmatpush.msra.mxu0 0.0
    %350 = vmatpush.msra.mxu0 0.0
    %351 = vmatpush.msra.mxu0 0.0
    %352 = vmatpush.msra.mxu0 0.0
    %353 = vmatpush.msra.mxu0 0.0
    %354 = vmatpush.msra.mxu0 %v56
    %355 = vmatpush.msra.mxu0 %v55
    %356 = vmatpush.msra.mxu0 %v54
    %357 = vmatpush.msra.mxu0 %v53
    %358 = vmatmul.f32.gmra.mxu0 %v297
    %v359 = vpop.f32.mrf.mxu0
    %v360 = vadd.f32 %v110, %v359
    %361 = vdwg.mxu0
    %362 = vmatpush.msra.mxu0 0.0
    %363 = vmatpush.msra.mxu0 0.0
    %364 = vmatpush.msra.mxu0 0.0
    %365 = vmatpush.msra.mxu0 0.0
    %366 = vmatpush.msra.mxu0 0.0
    %367 = vmatpush.msra.mxu0 0.0
    %368 = vmatpush.msra.mxu0 0.0
    %369 = vmatpush.msra.mxu0 0.0
    %370 = vmatpush.msra.mxu0 0.0
    %371 = vmatpush.msra.mxu0 0.0
    %372 = vmatpush.msra.mxu0 0.0
    %373 = vmatpush.msra.mxu0 0.0
    %374 = vmatpush.msra.mxu0 %v56
    %375 = vmatpush.msra.mxu0 %v55
    %376 = vmatpush.msra.mxu0 %v54
    %377 = vmatpush.msra.mxu0 %v53
    %378 = vmatmul.f32.gmra.mxu0 %v320
    %v379 = vpop.f32.mrf.mxu0
    %v380 = vadd.f32 %v110, %v379
    %381 = vdwg.mxu0
    %382 = vmatpush.msra.mxu0 0.0
    %383 = vmatpush.msra.mxu0 0.0
    %384 = vmatpush.msra.mxu0 0.0
    %385 = vmatpush.msra.mxu0 0.0
    %386 = vmatpush.msra.mxu0 0.0
    %387 = vmatpush.msra.mxu0 0.0
    %388 = vmatpush.msra.mxu0 0.0
    %389 = vmatpush.msra.mxu0 0.0
    %390 = vmatpush.msra.mxu0 0.0
    %391 = vmatpush.msra.mxu0 0.0
    %392 = vmatpush.msra.mxu0 0.0
    %393 = vmatpush.msra.mxu0 0.0
    %394 = vmatpush.msra.mxu0 %v60
    %395 = vmatpush.msra.mxu0 %v59
    %396 = vmatpush.msra.mxu0 %v58
    %397 = vmatpush.msra.mxu0 %v57
    %398 = vmatmul.f32.gmra.mxu0 %v297
    %v399 = vpop.f32.mrf.mxu0
    %v400 = vadd.f32 %v111, %v399
    %401 = vdwg.mxu0
    %402 = vmatpush.msra.mxu0 0.0
    %403 = vmatpush.msra.mxu0 0.0
    %404 = vmatpush.msra.mxu0 0.0
    %405 = vmatpush.msra.mxu0 0.0
    %406 = vmatpush.msra.mxu0 0.0
    %407 = vmatpush.msra.mxu0 0.0
    %408 = vmatpush.msra.mxu0 0.0
    %409 = vmatpush.msra.mxu0 0.0
    %410 = vmatpush.msra.mxu0 0.0
    %411 = vmatpush.msra.mxu0 0.0
    %412 = vmatpush.msra.mxu0 0.0
    %413 = vmatpush.msra.mxu0 0.0
    %414 = vmatpush.msra.mxu0 %v60
    %415 = vmatpush.msra.mxu0 %v59
    %416 = vmatpush.msra.mxu0 %v58
    %417 = vmatpush.msra.mxu0 %v57
    %418 = vmatmul.f32.gmra.mxu0 %v320
    %v419 = vpop.f32.mrf.mxu0
    %v420 = vadd.f32 %v111, %v419
    %421 = vdwg.mxu0
    %422 = vmatpush.msra.mxu0 0.0
    %423 = vmatpush.msra.mxu0 0.0
    %424 = vmatpush.msra.mxu0 0.0
    %425 = vmatpush.msra.mxu0 0.0
    %426 = vmatpush.msra.mxu0 0.0
    %427 = vmatpush.msra.mxu0 0.0
    %428 = vmatpush.msra.mxu0 0.0
    %429 = vmatpush.msra.mxu0 0.0
    %430 = vmatpush.msra.mxu0 0.0
    %431 = vmatpush.msra.mxu0 0.0
    %432 = vmatpush.msra.mxu0 0.0
    %433 = vmatpush.msra.mxu0 0.0
    %434 = vmatpush.msra.mxu0 %v64
    %435 = vmatpush.msra.mxu0 %v63
    %436 = vmatpush.msra.mxu0 %v62
    %437 = vmatpush.msra.mxu0 %v61
    %438 = vmatmul.f32.gmra.mxu0 %v297
    %v439 = vpop.f32.mrf.mxu0
    %v440 = vadd.f32 %v112, %v439
    %441 = vdwg.mxu0
    %442 = vmatpush.msra.mxu0 0.0
    %443 = vmatpush.msra.mxu0 0.0
    %444 = vmatpush.msra.mxu0 0.0
    %445 = vmatpush.msra.mxu0 0.0
    %446 = vmatpush.msra.mxu0 0.0
    %447 = vmatpush.msra.mxu0 0.0
    %448 = vmatpush.msra.mxu0 0.0
    %449 = vmatpush.msra.mxu0 0.0
    %450 = vmatpush.msra.mxu0 0.0
    %451 = vmatpush.msra.mxu0 0.0
    %452 = vmatpush.msra.mxu0 0.0
    %453 = vmatpush.msra.mxu0 0.0
    %454 = vmatpush.msra.mxu0 %v64
    %455 = vmatpush.msra.mxu0 %v63
    %456 = vmatpush.msra.mxu0 %v62
    %457 = vmatpush.msra.mxu0 %v61
    %458 = vmatmul.f32.gmra.mxu0 %v320
    %v459 = vpop.f32.mrf.mxu0
    %v460 = vadd.f32 %v112, %v459
    %461 = vdwg.mxu0
    %v463 = vsel %vm129, %v31, 0
    %465 = vmatpush.msra.mxu0 0.0
    %466 = vmatpush.msra.mxu0 0.0
    %467 = vmatpush.msra.mxu0 0.0
    %468 = vmatpush.msra.mxu0 0.0
    %469 = vmatpush.msra.mxu0 0.0
    %470 = vmatpush.msra.mxu0 0.0
    %471 = vmatpush.msra.mxu0 0.0
    %472 = vmatpush.msra.mxu0 0.0
    %473 = vmatpush.msra.mxu0 0.0
    %474 = vmatpush.msra.mxu0 0.0
    %475 = vmatpush.msra.mxu0 0.0
    %476 = vmatpush.msra.mxu0 0.0
    %477 = vmatpush.msra.mxu0 %v68
    %478 = vmatpush.msra.mxu0 %v67
    %479 = vmatpush.msra.mxu0 %v66
    %480 = vmatpush.msra.mxu0 %v65
    %481 = vmatmul.f32.gmra.mxu0 %v463
    %v482 = vpop.f32.mrf.mxu0
    %v483 = vadd.f32 %v113, %v482
    %484 = vdwg.mxu0
    %v486 = vsel %vm129, %v32, 0
    %488 = vmatpush.msra.mxu0 0.0
    %489 = vmatpush.msra.mxu0 0.0
    %490 = vmatpush.msra.mxu0 0.0
    %491 = vmatpush.msra.mxu0 0.0
    %492 = vmatpush.msra.mxu0 0.0
    %493 = vmatpush.msra.mxu0 0.0
    %494 = vmatpush.msra.mxu0 0.0
    %495 = vmatpush.msra.mxu0 0.0
    %496 = vmatpush.msra.mxu0 0.0
    %497 = vmatpush.msra.mxu0 0.0
    %498 = vmatpush.msra.mxu0 0.0
    %499 = vmatpush.msra.mxu0 0.0
    %500 = vmatpush.msra.mxu0 %v68
    %501 = vmatpush.msra.mxu0 %v67
    %502 = vmatpush.msra.mxu0 %v66
    %503 = vmatpush.msra.mxu0 %v65
    %504 = vmatmul.f32.gmra.mxu0 %v486
    %v505 = vpop.f32.mrf.mxu0
    %v506 = vadd.f32 %v113, %v505
    %507 = vdwg.mxu0
    %508 = vmatpush.msra.mxu0 0.0
    %509 = vmatpush.msra.mxu0 0.0
    %510 = vmatpush.msra.mxu0 0.0
    %511 = vmatpush.msra.mxu0 0.0
    %512 = vmatpush.msra.mxu0 0.0
    %513 = vmatpush.msra.mxu0 0.0
    %514 = vmatpush.msra.mxu0 0.0
    %515 = vmatpush.msra.mxu0 0.0
    %516 = vmatpush.msra.mxu0 0.0
    %517 = vmatpush.msra.mxu0 0.0
    %518 = vmatpush.msra.mxu0 0.0
    %519 = vmatpush.msra.mxu0 0.0
    %520 = vmatpush.msra.mxu0 %v72
    %521 = vmatpush.msra.mxu0 %v71
    %522 = vmatpush.msra.mxu0 %v70
    %523 = vmatpush.msra.mxu0 %v69
    %524 = vmatmul.f32.gmra.mxu0 %v463
    %v525 = vpop.f32.mrf.mxu0
    %v526 = vadd.f32 %v114, %v525
    %527 = vdwg.mxu0
    %528 = vmatpush.msra.mxu0 0.0
    %529 = vmatpush.msra.mxu0 0.0
    %530 = vmatpush.msra.mxu0 0.0
    %531 = vmatpush.msra.mxu0 0.0
    %532 = vmatpush.msra.mxu0 0.0
    %533 = vmatpush.msra.mxu0 0.0
    %534 = vmatpush.msra.mxu0 0.0
    %535 = vmatpush.msra.mxu0 0.0
    %536 = vmatpush.msra.mxu0 0.0
    %537 = vmatpush.msra.mxu0 0.0
    %538 = vmatpush.msra.mxu0 0.0
    %539 = vmatpush.msra.mxu0 0.0
    %540 = vmatpush.msra.mxu0 %v72
    %541 = vmatpush.msra.mxu0 %v71
    %542 = vmatpush.msra.mxu0 %v70
    %543 = vmatpush.msra.mxu0 %v69
    %544 = vmatmul.f32.gmra.mxu0 %v486
    %v545 = vpop.f32.mrf.mxu0
    %v546 = vadd.f32 %v114, %v545
    %547 = vdwg.mxu0
    %548 = vmatpush.msra.mxu0 0.0
    %549 = vmatpush.msra.mxu0 0.0
    %550 = vmatpush.msra.mxu0 0.0
    %551 = vmatpush.msra.mxu0 0.0
    %552 = vmatpush.msra.mxu0 0.0
    %553 = vmatpush.msra.mxu0 0.0
    %554 = vmatpush.msra.mxu0 0.0
    %555 = vmatpush.msra.mxu0 0.0
    %556 = vmatpush.msra.mxu0 0.0
    %557 = vmatpush.msra.mxu0 0.0
    %558 = vmatpush.msra.mxu0 0.0
    %559 = vmatpush.msra.mxu0 0.0
    %560 = vmatpush.msra.mxu0 %v76
    %561 = vmatpush.msra.mxu0 %v75
    %562 = vmatpush.msra.mxu0 %v74
    %563 = vmatpush.msra.mxu0 %v73
    %564 = vmatmul.f32.gmra.mxu0 %v463
    %v565 = vpop.f32.mrf.mxu0
    %v566 = vadd.f32 %v115, %v565
    %567 = vdwg.mxu0
    %568 = vmatpush.msra.mxu0 0.0
    %569 = vmatpush.msra.mxu0 0.0
    %570 = vmatpush.msra.mxu0 0.0
    %571 = vmatpush.msra.mxu0 0.0
    %572 = vmatpush.msra.mxu0 0.0
    %573 = vmatpush.msra.mxu0 0.0
    %574 = vmatpush.msra.mxu0 0.0
    %575 = vmatpush.msra.mxu0 0.0
    %576 = vmatpush.msra.mxu0 0.0
    %577 = vmatpush.msra.mxu0 0.0
    %578 = vmatpush.msra.mxu0 0.0
    %579 = vmatpush.msra.mxu0 0.0
    %580 = vmatpush.msra.mxu0 %v76
    %581 = vmatpush.msra.mxu0 %v75
    %582 = vmatpush.msra.mxu0 %v74
    %583 = vmatpush.msra.mxu0 %v73
    %584 = vmatmul.f32.gmra.mxu0 %v486
    %v585 = vpop.f32.mrf.mxu0
    %v586 = vadd.f32 %v115, %v585
    %587 = vdwg.mxu0
    %588 = vmatpush.msra.mxu0 0.0
    %589 = vmatpush.msra.mxu0 0.0
    %590 = vmatpush.msra.mxu0 0.0
    %591 = vmatpush.msra.mxu0 0.0
    %592 = vmatpush.msra.mxu0 0.0
    %593 = vmatpush.msra.mxu0 0.0
    %594 = vmatpush.msra.mxu0 0.0
    %595 = vmatpush.msra.mxu0 0.0
    %596 = vmatpush.msra.mxu0 0.0
    %597 = vmatpush.msra.mxu0 0.0
    %598 = vmatpush.msra.mxu0 0.0
    %599 = vmatpush.msra.mxu0 0.0
    %600 = vmatpush.msra.mxu0 %v80
    %601 = vmatpush.msra.mxu0 %v79
    %602 = vmatpush.msra.mxu0 %v78
    %603 = vmatpush.msra.mxu0 %v77
    %604 = vmatmul.f32.gmra.mxu0 %v463
    %v605 = vpop.f32.mrf.mxu0
    %v606 = vadd.f32 %v116, %v605
    %607 = vdwg.mxu0
    %608 = vmatpush.msra.mxu0 0.0
    %609 = vmatpush.msra.mxu0 0.0
    %610 = vmatpush.msra.mxu0 0.0
    %611 = vmatpush.msra.mxu0 0.0
    %612 = vmatpush.msra.mxu0 0.0
    %613 = vmatpush.msra.mxu0 0.0
    %614 = vmatpush.msra.mxu0 0.0
    %615 = vmatpush.msra.mxu0 0.0
    %616 = vmatpush.msra.mxu0 0.0
    %617 = vmatpush.msra.mxu0 0.0
    %618 = vmatpush.msra.mxu0 0.0
    %619 = vmatpush.msra.mxu0 0.0
    %620 = vmatpush.msra.mxu0 %v80
    %621 = vmatpush.msra.mxu0 %v79
    %622 = vmatpush.msra.mxu0 %v78
    %623 = vmatpush.msra.mxu0 %v77
    %624 = vmatmul.f32.gmra.mxu0 %v486
    %v625 = vpop.f32.mrf.mxu0
    %v626 = vadd.f32 %v116, %v625
    %627 = vdwg.mxu0
    %vm628 = vcmask 64512
    %v630 = vsel %vm628, %v151, 0
    %v633 = vsel %vm628, %v317, 0
    %635 = vmatpush.xpose.msra.mxu0 0.0
    %636 = vmatpush.xpose.msra.mxu0 0.0
    %637 = vmatpush.xpose.msra.mxu0 0.0
    %638 = vmatpush.xpose.msra.mxu0 0.0
    %639 = vmatpush.xpose.msra.mxu0 0.0
    %640 = vmatpush.xpose.msra.mxu0 0.0
    %641 = vmatpush.xpose.msra.mxu0 0.0
    %642 = vmatpush.xpose.msra.mxu0 0.0
    %643 = vmatpush.xpose.msra.mxu0 0.0
    %644 = vmatpush.xpose.msra.mxu0 0.0
    %645 = vmatpush.xpose.msra.mxu0 0.0
    %646 = vmatpush.xpose.msra.mxu0 0.0
    %647 = vmatpush.xpose.msra.mxu0 0.0
    %648 = vmatpush.xpose.msra.mxu0 0.0
    %649 = vmatpush.xpose.msra.mxu0 0.0
    %650 = vmatpush.xpose.msra.mxu0 %v633
    %651 = vmatmul.f32.gmra.mxu0 %v630
    %v652 = vpop.f32.mrf.mxu0
    %v653 = vadd.f32 0.0, %v652
    %654 = vdwg.mxu0
    %v656 = vsel %vm628, %v174, 0
    %v659 = vsel %vm628, %v340, 0
    %661 = vmatpush.xpose.msra.mxu0 0.0
    %662 = vmatpush.xpose.msra.mxu0 0.0
    %663 = vmatpush.xpose.msra.mxu0 0.0
    %664 = vmatpush.xpose.msra.mxu0 0.0
    %665 = vmatpush.xpose.msra.mxu0 0.0
    %666 = vmatpush.xpose.msra.mxu0 0.0
    %667 = vmatpush.xpose.msra.mxu0 0.0
    %668 = vmatpush.xpose.msra.mxu0 0.0
    %669 = vmatpush.xpose.msra.mxu0 0.0
    %670 = vmatpush.xpose.msra.mxu0 0.0
    %671 = vmatpush.xpose.msra.mxu0 0.0
    %672 = vmatpush.xpose.msra.mxu0 0.0
    %673 = vmatpush.xpose.msra.mxu0 0.0
    %674 = vmatpush.xpose.msra.mxu0 0.0
    %675 = vmatpush.xpose.msra.mxu0 0.0
    %676 = vmatpush.xpose.msra.mxu0 %v659
    %677 = vmatmul.f32.gmra.mxu0 %v656
    %v678 = vpop.f32.mrf.mxu0
    %v679 = vadd.f32 0.0, %v678
    %680 = vdwg.mxu0
    %v682 = vsel %vm628, %v194, 0
    %v685 = vsel %vm628, %v360, 0
    %687 = vmatpush.xpose.msra.mxu0 0.0
    %688 = vmatpush.xpose.msra.mxu0 0.0
    %689 = vmatpush.xpose.msra.mxu0 0.0
    %690 = vmatpush.xpose.msra.mxu0 0.0
    %691 = vmatpush.xpose.msra.mxu0 0.0
    %692 = vmatpush.xpose.msra.mxu0 0.0
    %693 = vmatpush.xpose.msra.mxu0 0.0
    %694 = vmatpush.xpose.msra.mxu0 0.0
    %695 = vmatpush.xpose.msra.mxu0 0.0
    %696 = vmatpush.xpose.msra.mxu0 0.0
    %697 = vmatpush.xpose.msra.mxu0 0.0
    %698 = vmatpush.xpose.msra.mxu0 0.0
    %699 = vmatpush.xpose.msra.mxu0 0.0
    %700 = vmatpush.xpose.msra.mxu0 0.0
    %701 = vmatpush.xpose.msra.mxu0 0.0
    %702 = vmatpush.xpose.msra.mxu0 %v685
    %703 = vmatmul.f32.gmra.mxu0 %v682
    %v704 = vpop.f32.mrf.mxu0
    %v705 = vadd.f32 0.0, %v704
    %706 = vdwg.mxu0
    %v708 = vsel %vm628, %v214, 0
    %v711 = vsel %vm628, %v380, 0
    %713 = vmatpush.xpose.msra.mxu0 0.0
    %714 = vmatpush.xpose.msra.mxu0 0.0
    %715 = vmatpush.xpose.msra.mxu0 0.0
    %716 = vmatpush.xpose.msra.mxu0 0.0
    %717 = vmatpush.xpose.msra.mxu0 0.0
    %718 = vmatpush.xpose.msra.mxu0 0.0
    %719 = vmatpush.xpose.msra.mxu0 0.0
    %720 = vmatpush.xpose.msra.mxu0 0.0
    %721 = vmatpush.xpose.msra.mxu0 0.0
    %722 = vmatpush.xpose.msra.mxu0 0.0
    %723 = vmatpush.xpose.msra.mxu0 0.0
    %724 = vmatpush.xpose.msra.mxu0 0.0
    %725 = vmatpush.xpose.msra.mxu0 0.0
    %726 = vmatpush.xpose.msra.mxu0 0.0
    %727 = vmatpush.xpose.msra.mxu0 0.0
    %728 = vmatpush.xpose.msra.mxu0 %v711
    %729 = vmatmul.f32.gmra.mxu0 %v708
    %v730 = vpop.f32.mrf.mxu0
    %v731 = vadd.f32 0.0, %v730
    %732 = vdwg.mxu0
    %v734 = vsel %vm628, %v234, 0
    %v737 = vsel %vm628, %v400, 0
    %739 = vmatpush.xpose.msra.mxu0 0.0
    %740 = vmatpush.xpose.msra.mxu0 0.0
    %741 = vmatpush.xpose.msra.mxu0 0.0
    %742 = vmatpush.xpose.msra.mxu0 0.0
    %743 = vmatpush.xpose.msra.mxu0 0.0
    %744 = vmatpush.xpose.msra.mxu0 0.0
    %745 = vmatpush.xpose.msra.mxu0 0.0
    %746 = vmatpush.xpose.msra.mxu0 0.0
    %747 = vmatpush.xpose.msra.mxu0 0.0
    %748 = vmatpush.xpose.msra.mxu0 0.0
    %749 = vmatpush.xpose.msra.mxu0 0.0
    %750 = vmatpush.xpose.msra.mxu0 0.0
    %751 = vmatpush.xpose.msra.mxu0 0.0
    %752 = vmatpush.xpose.msra.mxu0 0.0
    %753 = vmatpush.xpose.msra.mxu0 0.0
    %754 = vmatpush.xpose.msra.mxu0 %v737
    %755 = vmatmul.f32.gmra.mxu0 %v734
    %v756 = vpop.f32.mrf.mxu0
    %v757 = vadd.f32 0.0, %v756
    %758 = vdwg.mxu0
    %v760 = vsel %vm628, %v254, 0
    %v763 = vsel %vm628, %v420, 0
    %765 = vmatpush.xpose.msra.mxu0 0.0
    %766 = vmatpush.xpose.msra.mxu0 0.0
    %767 = vmatpush.xpose.msra.mxu0 0.0
    %768 = vmatpush.xpose.msra.mxu0 0.0
    %769 = vmatpush.xpose.msra.mxu0 0.0
    %770 = vmatpush.xpose.msra.mxu0 0.0
    %771 = vmatpush.xpose.msra.mxu0 0.0
    %772 = vmatpush.xpose.msra.mxu0 0.0
    %773 = vmatpush.xpose.msra.mxu0 0.0
    %774 = vmatpush.xpose.msra.mxu0 0.0
    %775 = vmatpush.xpose.msra.mxu0 0.0
    %776 = vmatpush.xpose.msra.mxu0 0.0
    %777 = vmatpush.xpose.msra.mxu0 0.0
    %778 = vmatpush.xpose.msra.mxu0 0.0
    %779 = vmatpush.xpose.msra.mxu0 0.0
    %780 = vmatpush.xpose.msra.mxu0 %v763
    %781 = vmatmul.f32.gmra.mxu0 %v760
    %v782 = vpop.f32.mrf.mxu0
    %v783 = vadd.f32 0.0, %v782
    %784 = vdwg.mxu0
    %v786 = vsel %vm628, %v274, 0
    %v789 = vsel %vm628, %v440, 0
    %791 = vmatpush.xpose.msra.mxu0 0.0
    %792 = vmatpush.xpose.msra.mxu0 0.0
    %793 = vmatpush.xpose.msra.mxu0 0.0
    %794 = vmatpush.xpose.msra.mxu0 0.0
    %795 = vmatpush.xpose.msra.mxu0 0.0
    %796 = vmatpush.xpose.msra.mxu0 0.0
    %797 = vmatpush.xpose.msra.mxu0 0.0
    %798 = vmatpush.xpose.msra.mxu0 0.0
    %799 = vmatpush.xpose.msra.mxu0 0.0
    %800 = vmatpush.xpose.msra.mxu0 0.0
    %801 = vmatpush.xpose.msra.mxu0 0.0
    %802 = vmatpush.xpose.msra.mxu0 0.0
    %803 = vmatpush.xpose.msra.mxu0 0.0
    %804 = vmatpush.xpose.msra.mxu0 0.0
    %805 = vmatpush.xpose.msra.mxu0 0.0
    %806 = vmatpush.xpose.msra.mxu0 %v789
    %807 = vmatmul.f32.gmra.mxu0 %v786
    %v808 = vpop.f32.mrf.mxu0
    %v809 = vadd.f32 0.0, %v808
    %810 = vdwg.mxu0
    %v812 = vsel %vm628, %v294, 0
    %v815 = vsel %vm628, %v460, 0
    %817 = vmatpush.xpose.msra.mxu0 0.0
    %818 = vmatpush.xpose.msra.mxu0 0.0
    %819 = vmatpush.xpose.msra.mxu0 0.0
    %820 = vmatpush.xpose.msra.mxu0 0.0
    %821 = vmatpush.xpose.msra.mxu0 0.0
    %822 = vmatpush.xpose.msra.mxu0 0.0
    %823 = vmatpush.xpose.msra.mxu0 0.0
    %824 = vmatpush.xpose.msra.mxu0 0.0
    %825 = vmatpush.xpose.msra.mxu0 0.0
    %826 = vmatpush.xpose.msra.mxu0 0.0
    %827 = vmatpush.xpose.msra.mxu0 0.0
    %828 = vmatpush.xpose.msra.mxu0 0.0
    %829 = vmatpush.xpose.msra.mxu0 0.0
    %830 = vmatpush.xpose.msra.mxu0 0.0
    %831 = vmatpush.xpose.msra.mxu0 0.0
    %832 = vmatpush.xpose.msra.mxu0 %v815
    %833 = vmatmul.f32.gmra.mxu0 %v812
    %v834 = vpop.f32.mrf.mxu0
    %v835 = vadd.f32 0.0, %v834
    %836 = vdwg.mxu0
    %v837 = vsel %vm628, %v653, -inf
    %838 = vmax.xlane.f32.xlu0 %v837
    %v839 = vpop.xlane.xlu0 %838
    %v840 = vsel %vm628, %v679, -inf
    %841 = vmax.xlane.f32.xlu0 %v840
    %v842 = vpop.xlane.xlu0 %841
    %v843 = vsel %vm628, %v705, -inf
    %844 = vmax.xlane.f32.xlu0 %v843
    %v845 = vpop.xlane.xlu0 %844
    %v846 = vsel %vm628, %v731, -inf
    %847 = vmax.xlane.f32.xlu0 %v846
    %v848 = vpop.xlane.xlu0 %847
    %v849 = vsel %vm628, %v757, -inf
    %850 = vmax.xlane.f32.xlu0 %v849
    %v851 = vpop.xlane.xlu0 %850
    %v852 = vsel %vm628, %v783, -inf
    %853 = vmax.xlane.f32.xlu0 %v852
    %v854 = vpop.xlane.xlu0 %853
    %v855 = vsel %vm628, %v809, -inf
    %856 = vmax.xlane.f32.xlu0 %v855
    %v857 = vpop.xlane.xlu0 %856
    %v858 = vsel %vm628, %v835, -inf
    %859 = vmax.xlane.f32.xlu0 %v858
    %v860 = vpop.xlane.xlu0 %859
    %v861 = vsub.f32 %v653, %v839
    %v862 = vsub.f32 %v679, %v842
    %v863 = vsub.f32 %v705, %v845
    %v864 = vsub.f32 %v731, %v848
    %v865 = vsub.f32 %v757, %v851
    %v866 = vsub.f32 %v783, %v854
    %v867 = vsub.f32 %v809, %v857
    %v868 = vsub.f32 %v835, %v860
    %v869 = vmul.f32 %v861, 1.442695
    %v870 = vpow.pop %v869
    %v871 = vmul.f32 %v862, 1.442695
    %v872 = vpow.pop %v871
    %v873 = vmul.f32 %v863, 1.442695
    %v874 = vpow.pop %v873
    %v875 = vmul.f32 %v864, 1.442695
    %v876 = vpow.pop %v875
    %v877 = vmul.f32 %v865, 1.442695
    %v878 = vpow.pop %v877
    %v879 = vmul.f32 %v866, 1.442695
    %v880 = vpow.pop %v879
    %v881 = vmul.f32 %v867, 1.442695
    %v882 = vpow.pop %v881
    %v883 = vmul.f32 %v868, 1.442695
    %v884 = vpow.pop %v883
    %v885 = vsel %vm628, %v870, 0.0
    %886 = vadd.xlane.f32.xlu0 %v885
    %v887 = vpop.xlane.xlu0 %886
    %v888 = vsel %vm628, %v872, 0.0
    %889 = vadd.xlane.f32.xlu0 %v888
    %v890 = vpop.xlane.xlu0 %889
    %v891 = vsel %vm628, %v874, 0.0
    %892 = vadd.xlane.f32.xlu0 %v891
    %v893 = vpop.xlane.xlu0 %892
    %v894 = vsel %vm628, %v876, 0.0
    %895 = vadd.xlane.f32.xlu0 %v894
    %v896 = vpop.xlane.xlu0 %895
    %v897 = vsel %vm628, %v878, 0.0
    %898 = vadd.xlane.f32.xlu0 %v897
    %v899 = vpop.xlane.xlu0 %898
    %v900 = vsel %vm628, %v880, 0.0
    %901 = vadd.xlane.f32.xlu0 %v900
    %v902 = vpop.xlane.xlu0 %901
    %v903 = vsel %vm628, %v882, 0.0
    %904 = vadd.xlane.f32.xlu0 %v903
    %v905 = vpop.xlane.xlu0 %904
    %v906 = vsel %vm628, %v884, 0.0
    %907 = vadd.xlane.f32.xlu0 %v906
    %v908 = vpop.xlane.xlu0 %907
    %v909 = vrcp.pop %v887
    %v910 = vmul.f32 %v887, %v909
    %v911 = vsub.f32 1.0, %v910
    %v912 = vmul.f32 %v909, %v911
    %v913 = vadd.f32 %v909, %v912
    %vm914 = vweird.f32 %v887
    %vm915 = vweird.f32 %v909
    %vm916 = vmor %vm914, %vm915
    %v917 = vsel %vm916, %v909, %v913
    %v918 = vand.u32 2147483647, %v887
    %vm919 = vcmp.eq.f32.partialorder %v918, 8.507059e+37
    %v920 = vand.u32 %v887, 2147483648
    %v921 = vor.u32 1.1754944e-38, %v920
    %v922 = vsel %vm919, %v921, %v917
    %v923 = vrcp.pop %v890
    %v924 = vmul.f32 %v890, %v923
    %v925 = vsub.f32 1.0, %v924
    %v926 = vmul.f32 %v923, %v925
    %v927 = vadd.f32 %v923, %v926
    %vm928 = vweird.f32 %v890
    %vm929 = vweird.f32 %v923
    %vm930 = vmor %vm928, %vm929
    %v931 = vsel %vm930, %v923, %v927
    %v932 = vand.u32 2147483647, %v890
    %vm933 = vcmp.eq.f32.partialorder %v932, 8.507059e+37
    %v934 = vand.u32 %v890, 2147483648
    %v935 = vor.u32 1.1754944e-38, %v934
    %v936 = vsel %vm933, %v935, %v931
    %v937 = vrcp.pop %v893
    %v938 = vmul.f32 %v893, %v937
    %v939 = vsub.f32 1.0, %v938
    %v940 = vmul.f32 %v937, %v939
    %v941 = vadd.f32 %v937, %v940
    %vm942 = vweird.f32 %v893
    %vm943 = vweird.f32 %v937
    %vm944 = vmor %vm942, %vm943
    %v945 = vsel %vm944, %v937, %v941
    %v946 = vand.u32 2147483647, %v893
    %vm947 = vcmp.eq.f32.partialorder %v946, 8.507059e+37
    %v948 = vand.u32 %v893, 2147483648
    %v949 = vor.u32 1.1754944e-38, %v948
    %v950 = vsel %vm947, %v949, %v945
    %v951 = vrcp.pop %v896
    %v952 = vmul.f32 %v896, %v951
    %v953 = vsub.f32 1.0, %v952
    %v954 = vmul.f32 %v951, %v953
    %v955 = vadd.f32 %v951, %v954
    %vm956 = vweird.f32 %v896
    %vm957 = vweird.f32 %v951
    %vm958 = vmor %vm956, %vm957
    %v959 = vsel %vm958, %v951, %v955
    %v960 = vand.u32 2147483647, %v896
    %vm961 = vcmp.eq.f32.partialorder %v960, 8.507059e+37
    %v962 = vand.u32 %v896, 2147483648
    %v963 = vor.u32 1.1754944e-38, %v962
    %v964 = vsel %vm961, %v963, %v959
    %v965 = vrcp.pop %v899
    %v966 = vmul.f32 %v899, %v965
    %v967 = vsub.f32 1.0, %v966
    %v968 = vmul.f32 %v965, %v967
    %v969 = vadd.f32 %v965, %v968
    %vm970 = vweird.f32 %v899
    %vm971 = vweird.f32 %v965
    %vm972 = vmor %vm970, %vm971
    %v973 = vsel %vm972, %v965, %v969
    %v974 = vand.u32 2147483647, %v899
    %vm975 = vcmp.eq.f32.partialorder %v974, 8.507059e+37
    %v976 = vand.u32 %v899, 2147483648
    %v977 = vor.u32 1.1754944e-38, %v976
    %v978 = vsel %vm975, %v977, %v973
    %v979 = vrcp.pop %v902
    %v980 = vmul.f32 %v902, %v979
    %v981 = vsub.f32 1.0, %v980
    %v982 = vmul.f32 %v979, %v981
    %v983 = vadd.f32 %v979, %v982
    %vm984 = vweird.f32 %v902
    %vm985 = vweird.f32 %v979
    %vm986 = vmor %vm984, %vm985
    %v987 = vsel %vm986, %v979, %v983
    %v988 = vand.u32 2147483647, %v902
    %vm989 = vcmp.eq.f32.partialorder %v988, 8.507059e+37
    %v990 = vand.u32 %v902, 2147483648
    %v991 = vor.u32 1.1754944e-38, %v990
    %v992 = vsel %vm989, %v991, %v987
    %v993 = vrcp.pop %v905
    %v994 = vmul.f32 %v905, %v993
    %v995 = vsub.f32 1.0, %v994
    %v996 = vmul.f32 %v993, %v995
    %v997 = vadd.f32 %v993, %v996
    %vm998 = vweird.f32 %v905
    %vm999 = vweird.f32 %v993
    %vm1000 = vmor %vm998, %vm999
    %v1001 = vsel %vm1000, %v993, %v997
    %v1002 = vand.u32 2147483647, %v905
    %vm1003 = vcmp.eq.f32.partialorder %v1002, 8.507059e+37
    %v1004 = vand.u32 %v905, 2147483648
    %v1005 = vor.u32 1.1754944e-38, %v1004
    %v1006 = vsel %vm1003, %v1005, %v1001
    %v1007 = vrcp.pop %v908
    %v1008 = vmul.f32 %v908, %v1007
    %v1009 = vsub.f32 1.0, %v1008
    %v1010 = vmul.f32 %v1007, %v1009
    %v1011 = vadd.f32 %v1007, %v1010
    %vm1012 = vweird.f32 %v908
    %vm1013 = vweird.f32 %v1007
    %vm1014 = vmor %vm1012, %vm1013
    %v1015 = vsel %vm1014, %v1007, %v1011
    %v1016 = vand.u32 2147483647, %v908
    %vm1017 = vcmp.eq.f32.partialorder %v1016, 8.507059e+37
    %v1018 = vand.u32 %v908, 2147483648
    %v1019 = vor.u32 1.1754944e-38, %v1018
    %v1020 = vsel %vm1017, %v1019, %v1015
    %v1021 = vmul.f32 %v870, %v922
    %v1022 = vmul.f32 %v872, %v936
    %v1023 = vmul.f32 %v874, %v950
    %v1024 = vmul.f32 %v876, %v964
    %v1025 = vmul.f32 %v878, %v978
    %v1026 = vmul.f32 %v880, %v992
    %v1027 = vmul.f32 %v882, %v1006
    %v1028 = vmul.f32 %v884, %v1020
    %v1030 = vsel %vm628, %v1021, 0
    %1032 = vmatpush.msra.mxu0 0.0
    %1033 = vmatpush.msra.mxu0 0.0
    %1034 = vmatpush.msra.mxu0 0.0
    %1035 = vmatpush.msra.mxu0 0.0
    %1036 = vmatpush.msra.mxu0 0.0
    %1037 = vmatpush.msra.mxu0 0.0
    %1038 = vmatpush.msra.mxu0 0.0
    %1039 = vmatpush.msra.mxu0 0.0
    %1040 = vmatpush.msra.mxu0 0.0
    %1041 = vmatpush.msra.mxu0 0.0
    %1042 = vmatpush.msra.mxu0 0.0
    %1043 = vmatpush.msra.mxu0 0.0
    %1044 = vmatpush.msra.mxu0 0.0
    %1045 = vmatpush.msra.mxu0 0.0
    %1046 = vmatpush.msra.mxu0 0.0
    %1047 = vmatpush.msra.mxu0 %v483
    %1048 = vmatmul.f32.gmra.mxu0 %v1030
    %v1049 = vpop.f32.mrf.mxu0
    %v1050 = vadd.f32 0.0, %v1049
    %1051 = vdwg.mxu0
    %v1053 = vsel %vm628, %v1022, 0
    %1055 = vmatpush.msra.mxu0 0.0
    %1056 = vmatpush.msra.mxu0 0.0
    %1057 = vmatpush.msra.mxu0 0.0
    %1058 = vmatpush.msra.mxu0 0.0
    %1059 = vmatpush.msra.mxu0 0.0
    %1060 = vmatpush.msra.mxu0 0.0
    %1061 = vmatpush.msra.mxu0 0.0
    %1062 = vmatpush.msra.mxu0 0.0
    %1063 = vmatpush.msra.mxu0 0.0
    %1064 = vmatpush.msra.mxu0 0.0
    %1065 = vmatpush.msra.mxu0 0.0
    %1066 = vmatpush.msra.mxu0 0.0
    %1067 = vmatpush.msra.mxu0 0.0
    %1068 = vmatpush.msra.mxu0 0.0
    %1069 = vmatpush.msra.mxu0 0.0
    %1070 = vmatpush.msra.mxu0 %v506
    %1071 = vmatmul.f32.gmra.mxu0 %v1053
    %v1072 = vpop.f32.mrf.mxu0
    %v1073 = vadd.f32 0.0, %v1072
    %1074 = vdwg.mxu0
    %v1076 = vsel %vm628, %v1023, 0
    %1078 = vmatpush.msra.mxu0 0.0
    %1079 = vmatpush.msra.mxu0 0.0
    %1080 = vmatpush.msra.mxu0 0.0
    %1081 = vmatpush.msra.mxu0 0.0
    %1082 = vmatpush.msra.mxu0 0.0
    %1083 = vmatpush.msra.mxu0 0.0
    %1084 = vmatpush.msra.mxu0 0.0
    %1085 = vmatpush.msra.mxu0 0.0
    %1086 = vmatpush.msra.mxu0 0.0
    %1087 = vmatpush.msra.mxu0 0.0
    %1088 = vmatpush.msra.mxu0 0.0
    %1089 = vmatpush.msra.mxu0 0.0
    %1090 = vmatpush.msra.mxu0 0.0
    %1091 = vmatpush.msra.mxu0 0.0
    %1092 = vmatpush.msra.mxu0 0.0
    %1093 = vmatpush.msra.mxu0 %v526
    %1094 = vmatmul.f32.gmra.mxu0 %v1076
    %v1095 = vpop.f32.mrf.mxu0
    %v1096 = vadd.f32 0.0, %v1095
    %1097 = vdwg.mxu0
    %v1099 = vsel %vm628, %v1024, 0
    %1101 = vmatpush.msra.mxu0 0.0
    %1102 = vmatpush.msra.mxu0 0.0
    %1103 = vmatpush.msra.mxu0 0.0
    %1104 = vmatpush.msra.mxu0 0.0
    %1105 = vmatpush.msra.mxu0 0.0
    %1106 = vmatpush.msra.mxu0 0.0
    %1107 = vmatpush.msra.mxu0 0.0
    %1108 = vmatpush.msra.mxu0 0.0
    %1109 = vmatpush.msra.mxu0 0.0
    %1110 = vmatpush.msra.mxu0 0.0
    %1111 = vmatpush.msra.mxu0 0.0
    %1112 = vmatpush.msra.mxu0 0.0
    %1113 = vmatpush.msra.mxu0 0.0
    %1114 = vmatpush.msra.mxu0 0.0
    %1115 = vmatpush.msra.mxu0 0.0
    %1116 = vmatpush.msra.mxu0 %v546
    %1117 = vmatmul.f32.gmra.mxu0 %v1099
    %v1118 = vpop.f32.mrf.mxu0
    %v1119 = vadd.f32 0.0, %v1118
    %1120 = vdwg.mxu0
    %v1122 = vsel %vm628, %v1025, 0
    %1124 = vmatpush.msra.mxu0 0.0
    %1125 = vmatpush.msra.mxu0 0.0
    %1126 = vmatpush.msra.mxu0 0.0
    %1127 = vmatpush.msra.mxu0 0.0
    %1128 = vmatpush.msra.mxu0 0.0
    %1129 = vmatpush.msra.mxu0 0.0
    %1130 = vmatpush.msra.mxu0 0.0
    %1131 = vmatpush.msra.mxu0 0.0
    %1132 = vmatpush.msra.mxu0 0.0
    %1133 = vmatpush.msra.mxu0 0.0
    %1134 = vmatpush.msra.mxu0 0.0
    %1135 = vmatpush.msra.mxu0 0.0
    %1136 = vmatpush.msra.mxu0 0.0
    %1137 = vmatpush.msra.mxu0 0.0
    %1138 = vmatpush.msra.mxu0 0.0
    %1139 = vmatpush.msra.mxu0 %v566
    %1140 = vmatmul.f32.gmra.mxu0 %v1122
    %v1141 = vpop.f32.mrf.mxu0
    %v1142 = vadd.f32 0.0, %v1141
    %1143 = vdwg.mxu0
    %v1145 = vsel %vm628, %v1026, 0
    %1147 = vmatpush.msra.mxu0 0.0
    %1148 = vmatpush.msra.mxu0 0.0
    %1149 = vmatpush.msra.mxu0 0.0
    %1150 = vmatpush.msra.mxu0 0.0
    %1151 = vmatpush.msra.mxu0 0.0
    %1152 = vmatpush.msra.mxu0 0.0
    %1153 = vmatpush.msra.mxu0 0.0
    %1154 = vmatpush.msra.mxu0 0.0
    %1155 = vmatpush.msra.mxu0 0.0
    %1156 = vmatpush.msra.mxu0 0.0
    %1157 = vmatpush.msra.mxu0 0.0
    %1158 = vmatpush.msra.mxu0 0.0
    %1159 = vmatpush.msra.mxu0 0.0
    %1160 = vmatpush.msra.mxu0 0.0
    %1161 = vmatpush.msra.mxu0 0.0
    %1162 = vmatpush.msra.mxu0 %v586
    %1163 = vmatmul.f32.gmra.mxu0 %v1145
    %v1164 = vpop.f32.mrf.mxu0
    %v1165 = vadd.f32 0.0, %v1164
    %1166 = vdwg.mxu0
    %v1168 = vsel %vm628, %v1027, 0
    %1170 = vmatpush.msra.mxu0 0.0
    %1171 = vmatpush.msra.mxu0 0.0
    %1172 = vmatpush.msra.mxu0 0.0
    %1173 = vmatpush.msra.mxu0 0.0
    %1174 = vmatpush.msra.mxu0 0.0
    %1175 = vmatpush.msra.mxu0 0.0
    %1176 = vmatpush.msra.mxu0 0.0
    %1177 = vmatpush.msra.mxu0 0.0
    %1178 = vmatpush.msra.mxu0 0.0
    %1179 = vmatpush.msra.mxu0 0.0
    %1180 = vmatpush.msra.mxu0 0.0
    %1181 = vmatpush.msra.mxu0 0.0
    %1182 = vmatpush.msra.mxu0 0.0
    %1183 = vmatpush.msra.mxu0 0.0
    %1184 = vmatpush.msra.mxu0 0.0
    %1185 = vmatpush.msra.mxu0 %v606
    %1186 = vmatmul.f32.gmra.mxu0 %v1168
    %v1187 = vpop.f32.mrf.mxu0
    %v1188 = vadd.f32 0.0, %v1187
    %1189 = vdwg.mxu0
    %v1191 = vsel %vm628, %v1028, 0
    %1193 = vmatpush.msra.mxu0 0.0
    %1194 = vmatpush.msra.mxu0 0.0
    %1195 = vmatpush.msra.mxu0 0.0
    %1196 = vmatpush.msra.mxu0 0.0
    %1197 = vmatpush.msra.mxu0 0.0
    %1198 = vmatpush.msra.mxu0 0.0
    %1199 = vmatpush.msra.mxu0 0.0
    %1200 = vmatpush.msra.mxu0 0.0
    %1201 = vmatpush.msra.mxu0 0.0
    %1202 = vmatpush.msra.mxu0 0.0
    %1203 = vmatpush.msra.mxu0 0.0
    %1204 = vmatpush.msra.mxu0 0.0
    %1205 = vmatpush.msra.mxu0 0.0
    %1206 = vmatpush.msra.mxu0 0.0
    %1207 = vmatpush.msra.mxu0 0.0
    %1208 = vmatpush.msra.mxu0 %v626
    %1209 = vmatmul.f32.gmra.mxu0 %v1191
    %v1210 = vpop.f32.mrf.mxu0
    %v1211 = vadd.f32 0.0, %v1210
    %1212 = vdwg.mxu0
    %v1213 = vld [vmem:[%s5] sm:$0xff]
    %v1214 = vld [vmem:[%s5 + $0x8] sm:$0xff]
    %v1215 = vld [vmem:[%s5 + $0x10] sm:$0xff]
    %v1216 = vld [vmem:[%s5 + $0x18] sm:$0xff]
    %v1218 = vsel %vm628, %v1050, 0
    %1220 = vmatpush.msra.mxu0 0.0
    %1221 = vmatpush.msra.mxu0 0.0
    %1222 = vmatpush.msra.mxu0 0.0
    %1223 = vmatpush.msra.mxu0 0.0
    %1224 = vmatpush.msra.mxu0 0.0
    %1225 = vmatpush.msra.mxu0 0.0
    %1226 = vmatpush.msra.mxu0 0.0
    %1227 = vmatpush.msra.mxu0 0.0
    %1228 = vmatpush.msra.mxu0 0.0
    %1229 = vmatpush.msra.mxu0 0.0
    %1230 = vmatpush.msra.mxu0 0.0
    %1231 = vmatpush.msra.mxu0 0.0
    %1232 = vmatpush.msra.mxu0 0.0
    %1233 = vmatpush.msra.mxu0 0.0
    %1234 = vmatpush.msra.mxu0 0.0
    %1235 = vmatpush.msra.mxu0 %v1213
    %1236 = vmatmul.f32.gmra.mxu0 %v1218
    %v1237 = vpop.f32.mrf.mxu0
    %v1238 = vadd.f32 0.0, %v1237
    %1239 = vdwg.mxu0
    %v1241 = vsel %vm628, %v1073, 0
    %1243 = vmatpush.msra.mxu0 0.0
    %1244 = vmatpush.msra.mxu0 0.0
    %1245 = vmatpush.msra.mxu0 0.0
    %1246 = vmatpush.msra.mxu0 0.0
    %1247 = vmatpush.msra.mxu0 0.0
    %1248 = vmatpush.msra.mxu0 0.0
    %1249 = vmatpush.msra.mxu0 0.0
    %1250 = vmatpush.msra.mxu0 0.0
    %1251 = vmatpush.msra.mxu0 0.0
    %1252 = vmatpush.msra.mxu0 0.0
    %1253 = vmatpush.msra.mxu0 0.0
    %1254 = vmatpush.msra.mxu0 0.0
    %1255 = vmatpush.msra.mxu0 0.0
    %1256 = vmatpush.msra.mxu0 0.0
    %1257 = vmatpush.msra.mxu0 0.0
    %1258 = vmatpush.msra.mxu0 %v1213
    %1259 = vmatmul.f32.gmra.mxu0 %v1241
    %v1260 = vpop.f32.mrf.mxu0
    %v1261 = vadd.f32 0.0, %v1260
    %1262 = vdwg.mxu0
    %v1264 = vsel %vm628, %v1096, 0
    %1266 = vmatpush.msra.mxu0 0.0
    %1267 = vmatpush.msra.mxu0 0.0
    %1268 = vmatpush.msra.mxu0 0.0
    %1269 = vmatpush.msra.mxu0 0.0
    %1270 = vmatpush.msra.mxu0 0.0
    %1271 = vmatpush.msra.mxu0 0.0
    %1272 = vmatpush.msra.mxu0 0.0
    %1273 = vmatpush.msra.mxu0 0.0
    %1274 = vmatpush.msra.mxu0 0.0
    %1275 = vmatpush.msra.mxu0 0.0
    %1276 = vmatpush.msra.mxu0 0.0
    %1277 = vmatpush.msra.mxu0 0.0
    %1278 = vmatpush.msra.mxu0 0.0
    %1279 = vmatpush.msra.mxu0 0.0
    %1280 = vmatpush.msra.mxu0 0.0
    %1281 = vmatpush.msra.mxu0 %v1214
    %1282 = vmatmul.f32.gmra.mxu0 %v1264
    %v1283 = vpop.f32.mrf.mxu0
    %v1284 = vadd.f32 0.0, %v1283
    %1285 = vdwg.mxu0
    %v1287 = vsel %vm628, %v1119, 0
    %1289 = vmatpush.msra.mxu0 0.0
    %1290 = vmatpush.msra.mxu0 0.0
    %1291 = vmatpush.msra.mxu0 0.0
    %1292 = vmatpush.msra.mxu0 0.0
    %1293 = vmatpush.msra.mxu0 0.0
    %1294 = vmatpush.msra.mxu0 0.0
    %1295 = vmatpush.msra.mxu0 0.0
    %1296 = vmatpush.msra.mxu0 0.0
    %1297 = vmatpush.msra.mxu0 0.0
    %1298 = vmatpush.msra.mxu0 0.0
    %1299 = vmatpush.msra.mxu0 0.0
    %1300 = vmatpush.msra.mxu0 0.0
    %1301 = vmatpush.msra.mxu0 0.0
    %1302 = vmatpush.msra.mxu0 0.0
    %1303 = vmatpush.msra.mxu0 0.0
    %1304 = vmatpush.msra.mxu0 %v1214
    %1305 = vmatmul.f32.gmra.mxu0 %v1287
    %v1306 = vpop.f32.mrf.mxu0
    %v1307 = vadd.f32 0.0, %v1306
    %1308 = vdwg.mxu0
    %v1310 = vsel %vm628, %v1142, 0
    %1312 = vmatpush.msra.mxu0 0.0
    %1313 = vmatpush.msra.mxu0 0.0
    %1314 = vmatpush.msra.mxu0 0.0
    %1315 = vmatpush.msra.mxu0 0.0
    %1316 = vmatpush.msra.mxu0 0.0
    %1317 = vmatpush.msra.mxu0 0.0
    %1318 = vmatpush.msra.mxu0 0.0
    %1319 = vmatpush.msra.mxu0 0.0
    %1320 = vmatpush.msra.mxu0 0.0
    %1321 = vmatpush.msra.mxu0 0.0
    %1322 = vmatpush.msra.mxu0 0.0
    %1323 = vmatpush.msra.mxu0 0.0
    %1324 = vmatpush.msra.mxu0 0.0
    %1325 = vmatpush.msra.mxu0 0.0
    %1326 = vmatpush.msra.mxu0 0.0
    %1327 = vmatpush.msra.mxu0 %v1215
    %1328 = vmatmul.f32.gmra.mxu0 %v1310
    %v1329 = vpop.f32.mrf.mxu0
    %v1330 = vadd.f32 0.0, %v1329
    %1331 = vdwg.mxu0
    %v1333 = vsel %vm628, %v1165, 0
    %1335 = vmatpush.msra.mxu0 0.0
    %1336 = vmatpush.msra.mxu0 0.0
    %1337 = vmatpush.msra.mxu0 0.0
    %1338 = vmatpush.msra.mxu0 0.0
    %1339 = vmatpush.msra.mxu0 0.0
    %1340 = vmatpush.msra.mxu0 0.0
    %1341 = vmatpush.msra.mxu0 0.0
    %1342 = vmatpush.msra.mxu0 0.0
    %1343 = vmatpush.msra.mxu0 0.0
    %1344 = vmatpush.msra.mxu0 0.0
    %1345 = vmatpush.msra.mxu0 0.0
    %1346 = vmatpush.msra.mxu0 0.0
    %1347 = vmatpush.msra.mxu0 0.0
    %1348 = vmatpush.msra.mxu0 0.0
    %1349 = vmatpush.msra.mxu0 0.0
    %1350 = vmatpush.msra.mxu0 %v1215
    %1351 = vmatmul.f32.gmra.mxu0 %v1333
    %v1352 = vpop.f32.mrf.mxu0
    %v1353 = vadd.f32 0.0, %v1352
    %1354 = vdwg.mxu0
    %v1356 = vsel %vm628, %v1188, 0
    %1358 = vmatpush.msra.mxu0 0.0
    %1359 = vmatpush.msra.mxu0 0.0
    %1360 = vmatpush.msra.mxu0 0.0
    %1361 = vmatpush.msra.mxu0 0.0
    %1362 = vmatpush.msra.mxu0 0.0
    %1363 = vmatpush.msra.mxu0 0.0
    %1364 = vmatpush.msra.mxu0 0.0
    %1365 = vmatpush.msra.mxu0 0.0
    %1366 = vmatpush.msra.mxu0 0.0
    %1367 = vmatpush.msra.mxu0 0.0
    %1368 = vmatpush.msra.mxu0 0.0
    %1369 = vmatpush.msra.mxu0 0.0
    %1370 = vmatpush.msra.mxu0 0.0
    %1371 = vmatpush.msra.mxu0 0.0
    %1372 = vmatpush.msra.mxu0 0.0
    %1373 = vmatpush.msra.mxu0 %v1216
    %1374 = vmatmul.f32.gmra.mxu0 %v1356
    %v1375 = vpop.f32.mrf.mxu0
    %v1376 = vadd.f32 0.0, %v1375
    %1377 = vdwg.mxu0
    %v1379 = vsel %vm628, %v1211, 0
    %1381 = vmatpush.msra.mxu0 0.0
    %1382 = vmatpush.msra.mxu0 0.0
    %1383 = vmatpush.msra.mxu0 0.0
    %1384 = vmatpush.msra.mxu0 0.0
    %1385 = vmatpush.msra.mxu0 0.0
    %1386 = vmatpush.msra.mxu0 0.0
    %1387 = vmatpush.msra.mxu0 0.0
    %1388 = vmatpush.msra.mxu0 0.0
    %1389 = vmatpush.msra.mxu0 0.0
    %1390 = vmatpush.msra.mxu0 0.0
    %1391 = vmatpush.msra.mxu0 0.0
    %1392 = vmatpush.msra.mxu0 0.0
    %1393 = vmatpush.msra.mxu0 0.0
    %1394 = vmatpush.msra.mxu0 0.0
    %1395 = vmatpush.msra.mxu0 0.0
    %1396 = vmatpush.msra.mxu0 %v1216
    %1397 = vmatmul.f32.gmra.mxu0 %v1379
    %v1398 = vpop.f32.mrf.mxu0
    %v1399 = vadd.f32 0.0, %v1398
    %1400 = vdwg.mxu0
    %v1401 = vsel %vm129, %v1238, 0.0
    %v1402 = vsel %vm129, %v1284, 0.0
    %v1403 = vadd.f32 %v1401, %v1402
    %v1404 = vsel %vm129, %v1330, 0.0
    %v1405 = vadd.f32 %v1403, %v1404
    %v1406 = vsel %vm129, %v1376, 0.0
    %v1407 = vadd.f32 %v1405, %v1406
    %v1408 = vsel %vm129, %v1261, 0.0
    %v1409 = vsel %vm129, %v1307, 0.0
    %v1410 = vadd.f32 %v1408, %v1409
    %v1411 = vsel %vm129, %v1353, 0.0
    %v1412 = vadd.f32 %v1410, %v1411
    %v1413 = vsel %vm129, %v1399, 0.0
    %v1414 = vadd.f32 %v1412, %v1413
    %v1415 = vld [vmem:[%s6] sm:$0x1]
    %v1417 = vperm.slane %v1415, 0
    %v1419 = vadd.f32 %v1407, %v1417
    %v1420 = vadd.f32 %v1414, %v1417
    %1421 = vst.msk [vmem:[#allocation2] sm:$0xff] %vm129, %v1419
    %1422 = vst.msk [vmem:[#allocation2 + $0x8] sm:$0xff] %vm129, %v1420
    // Predicated region
    $region30: #{tpu_custom_call.1} parent=1 // pred_check
      _
    $region31: #{tpu_custom_call.1} parent=1 // pred_check_branch
      %1424 = sbr.rel (0) target = $region33
    $region32: #{tpu_custom_call.1} parent=1 // pred_region
      %1426 = vsyncadd [#allocation3], 0
      %s1427 = sshll.u32 [#allocation2], 4
      %s1428 = int_to_ptr.vmem [resolvable:$true] %s1427
      %s1429 = sshll.u32 %s7, 4
      %s1430 = int_to_ptr.hbm [resolvable:$true] %s1429
      %1435 = dma.vmem_to_hbm [thread:$0]  %s1428, 256, %s1430, [#allocation3], 128, 128, 8
    $region33: #{tpu_custom_call.1} parent=1 // pred_fallthru
      _
    // Predicated region
    $region34: #{tpu_custom_call.1} parent=1 // pred_check
      _
    $region35: #{tpu_custom_call.1} parent=1 // pred_check_branch
      %1437 = sbr.rel (0) target = $region37
    $region36: #{tpu_custom_call.1} parent=1 // pred_region
      %1439 = dma.done [#allocation3], 256
    $region37: #{tpu_custom_call.1} parent=1 // pred_fallthru
      _
    %1440 = vsyncpa [#allocation3], 1

</llo_original>
